<compile_context>
chip_gen: v6e
topology: v6e:2x2x1
jax: 0.10.0
libtpu: 0.0.40
codegen_flags: <defaults>
</compile_context>

<pallas_src>
import numpy as np
import jax
import jax.numpy as jnp
from jax.experimental import pallas as pl
from jax.experimental.pallas import tpu as pltpu

VISION_VECTOR_SIZE = 8  # stand-in for config.VISION_VECTOR_SIZE


def _round_up(x, m):
    return ((x + m - 1) // m) * m


# --------------------------------------------------------------------------
# Pallas kernels (channel-major / lane-dense layouts)
# --------------------------------------------------------------------------
def _conv1_kernel(p_ref, w_ref, b_ref, o_ref):
    # p_ref: (K1p, Mt) bf16 patches^T, w_ref: (C1, K1p) bf16, b_ref: (C1,1) f32
    acc = jnp.dot(w_ref[...], p_ref[...], preferred_element_type=jnp.float32)
    o_ref[...] = jnp.maximum(acc + b_ref[...], 0.0).astype(o_ref.dtype)


def _conv2_pool_kernel(p_ref, w_ref, b_ref, m_ref, o_ref):
    # conv2 matmul + bias + ReLU, then AdaptiveAvgPool2d((1, V)) for the whole
    # 16-image block as one block-diagonal pooling matmul (bf16 operands,
    # f32 accumulation); output block is lane-dense (32, 128).
    y = jnp.dot(w_ref[...], p_ref[...], preferred_element_type=jnp.float32)
    y = jnp.maximum(y + b_ref[...], 0.0).astype(jnp.bfloat16)   # (C2, B*P2p)
    o_ref[...] = jnp.dot(y, m_ref[...], preferred_element_type=jnp.float32)


# --------------------------------------------------------------------------
# Pallas wrappers
# --------------------------------------------------------------------------
def _conv1(p1T, w1T, b1, Mt):
    K1p, M1p = p1T.shape
    C1 = w1T.shape[0]
    flops = 2 * C1 * K1p * M1p
    bytes_accessed = p1T.size * 2 + w1T.size * 2 + b1.size * 4 + C1 * M1p * 2
    return pl.pallas_call(
        _conv1_kernel,
        out_shape=jax.ShapeDtypeStruct((C1, M1p), jnp.bfloat16),
        grid=(M1p // Mt,),
        in_specs=[
            pl.BlockSpec((K1p, Mt), lambda m: (0, m)),
            pl.BlockSpec((C1, K1p), lambda m: (0, 0)),
            pl.BlockSpec((C1, 1), lambda m: (0, 0)),
        ],
        out_specs=pl.BlockSpec((C1, Mt), lambda m: (0, m)),
        compiler_params=pltpu.CompilerParams(
            dimension_semantics=("parallel",)),
        cost_estimate=pl.CostEstimate(flops=flops, transcendentals=0,
                                      bytes_accessed=bytes_accessed),
    )(p1T, w1T, b1)


def _conv2_pool(p2T, w2T, b2, pool_bd):
    K2, L = p2T.shape
    C2 = w2T.shape[0]
    BP, BV = pool_bd.shape            # B_img*P2p, B_img*V  (= 512, 128)
    n_blk = L // BP
    flops = 2 * C2 * K2 * L + 2 * C2 * BP * BV * n_blk
    bytes_accessed = (p2T.size * 2 + w2T.size * 2 + b2.size * 4
                      + pool_bd.size * 2 + C2 * n_blk * BV * 4)
    return pl.pallas_call(
        _conv2_pool_kernel,
        out_shape=jax.ShapeDtypeStruct((C2, n_blk * BV), jnp.float32),
        grid=(n_blk,),
        in_specs=[
            pl.BlockSpec((K2, BP), lambda g: (0, g)),
            pl.BlockSpec((C2, K2), lambda g: (0, 0)),
            pl.BlockSpec((C2, 1), lambda g: (0, 0)),
            pl.BlockSpec((BP, BV), lambda g: (0, 0)),
        ],
        out_specs=pl.BlockSpec((C2, BV), lambda g: (0, g)),
        compiler_params=pltpu.CompilerParams(
            dimension_semantics=("parallel",)),
        cost_estimate=pl.CostEstimate(flops=flops, transcendentals=0,
                                      bytes_accessed=bytes_accessed),
    )(p2T, w2T, b2, pool_bd)


# --------------------------------------------------------------------------
# Plain-JAX glue: channel-major im2col, pooling matrix, parameter prep
# --------------------------------------------------------------------------
def _im2col_T_cmajor(x_cnhw, k, stride):
    # (C, N, H, W) -> (k*k*C, N*Ho*Wo); K-order (kh, kw, c), M-order (n, i, j)
    C, N, H, W = x_cnhw.shape
    Ho = (H - k) // stride + 1
    Wo = (W - k) // stride + 1
    taps = []
    for kh in range(k):
        for kw in range(k):
            taps.append(x_cnhw[:, :, kh:kh + stride * (Ho - 1) + 1:stride,
                               kw:kw + stride * (Wo - 1) + 1:stride])
    t = jnp.stack(taps, axis=0)                 # (k*k, C, N, Ho, Wo)
    return t.reshape(k * k * C, N * Ho * Wo), Ho, Wo


def _pool_T(Hc, Wc, V, P_pad):
    # AdaptiveAvgPool2d((1, V)) over an (Hc, Wc) map as a (P_pad, V) matrix;
    # rows >= Hc*Wc are zero (lane padding positions contribute nothing).
    M = np.zeros((P_pad, V), np.float32)
    for v in range(V):
        s = (v * Wc) // V
        e = -(-((v + 1) * Wc) // V)  # ceil
        for h in range(Hc):
            for w in range(s, e):
                M[h * Wc + w, v] = 1.0 / (Hc * (e - s))
    return M


def init_params(key):
    k1, k2, k3, k4 = jax.random.split(key, 4)
    w1 = jax.random.normal(k1, (16, 3, 5, 5), jnp.float32) * 0.10
    b1 = jax.random.normal(k2, (16,), jnp.float32) * 0.10
    w2 = jax.random.normal(k3, (32, 16, 5, 5), jnp.float32) * 0.05
    b2 = jax.random.normal(k4, (32,), jnp.float32) * 0.05
    return w1, b1, w2, b2


def vision_cnn_encoder(x_nchw, w1, b1, w2, b2):
    N = x_nchw.shape[0]
    V = VISION_VECTOR_SIZE
    C1, C2, KSZ = 16, 32, 5

    # Channel-major bf16 input; all patch extraction happens in bf16.
    x_cm = jnp.transpose(x_nchw, (1, 0, 2, 3)).astype(jnp.bfloat16)  # (3,N,H,W)

    # ---- Conv2d(3, 16, k=5, s=2) + ReLU : one lane-dense matmul kernel ----
    p1T, H1, W1 = _im2col_T_cmajor(x_cm, KSZ, 2)        # (75, N*H1*W1) bf16
    K1 = p1T.shape[0]
    K1p = _round_up(K1, 16)                             # 75 -> 80: clean bf16 sublanes
    M1 = N * H1 * W1
    # >= 2 grid steps (keeps both v7x TensorCores busy), tile up to 2048 lanes.
    Mt = min(2048, _round_up(max(M1 // 2, 128), 128))
    M1p = _round_up(M1, Mt)
    if M1p // Mt < 2:
        M1p = 2 * Mt
    p1T = jnp.pad(p1T, ((0, K1p - K1), (0, M1p - M1)))
    w1T = jnp.transpose(w1, (0, 2, 3, 1)).reshape(C1, K1)
    w1T = jnp.pad(w1T, ((0, 0), (0, K1p - K1))).astype(jnp.bfloat16)
    h1T = _conv1(p1T, w1T, b1.reshape(C1, 1).astype(jnp.float32), Mt)  # (16, M1p)

    # Stay channel-major between stages (no NHWC round trip).
    h1_cm = h1T[:, :M1].reshape(C1, N, H1, W1)          # (16, N, H1, W1) bf16

    # ---- Conv2d(16, 32, k=5, s=2) + ReLU + AdaptiveAvgPool2d((1, V)) fused ----
    p2T, H2, W2 = _im2col_T_cmajor(h1_cm, KSZ, 2)       # (400, N*H2*W2) bf16
    K2 = p2T.shape[0]
    P2 = H2 * W2
    P2p = _round_up(P2, 32)           # per-image lane padding for alignment
    B_img = 16                        # fixed: B_img*V = 128 -> lane-dense output
    N_pad = _round_up(N, B_img)
    p2T = p2T.reshape(K2, N, P2)
    p2T = jnp.pad(p2T, ((0, 0), (0, N_pad - N), (0, P2p - P2)))
    p2T = p2T.reshape(K2, N_pad * P2p)
    w2T = jnp.transpose(w2, (0, 2, 3, 1)).reshape(C2, K2).astype(jnp.bfloat16)
    pool_bd = jnp.asarray(np.kron(np.eye(B_img, dtype=np.float32),
                                  _pool_T(H2, W2, V, P2p))
                          ).astype(jnp.bfloat16)        # (B*P2p, B*V) = (512,128)
    outT = _conv2_pool(p2T, w2T, b2.reshape(C2, 1).astype(jnp.float32),
                       pool_bd)                         # (32, N_pad*V) f32

    # (32, N_pad*V) -> (N, 32, 1, V)  (PyTorch NCHW output of AdaptiveAvgPool2d)
    out = jnp.transpose(outT.reshape(C2, N_pad, V)[:, :N], (1, 0, 2))
    return out[:, :, None, :]


# --------------------------------------------------------------------------
# Pure-JAX f32 reference (correctness check only)
# --------------------------------------------------------------------------
def reference(x_nchw, w1, b1, w2, b2, V):
    hi = jax.lax.Precision.HIGHEST
    y = jax.lax.conv_general_dilated(
        x_nchw, w1, (2, 2), "VALID",
        dimension_numbers=("NCHW", "OIHW", "NCHW"), precision=hi)
    y = jnp.maximum(y + b1[None, :, None, None], 0.0)
    y = jax.lax.conv_general_dilated(
        y, w2, (2, 2), "VALID",
        dimension_numbers=("NCHW", "OIHW", "NCHW"), precision=hi)
    y = jnp.maximum(y + b2[None, :, None, None], 0.0)
    N, C, H, W = y.shape
    outs = []
    for j in range(V):
        s = (j * W) // V
        e = -(-((j + 1) * W) // V)
        outs.append(jnp.mean(y[:, :, :, s:e], axis=(2, 3)))
    return jnp.stack(outs, axis=-1)[:, :, None, :]


if __name__ == "__main__":
    key = jax.random.PRNGKey(0)
    kx, kp = jax.random.split(key)
    x = jax.random.normal(kx, (2, 3, 32, 32), jnp.float32)
    w1, b1, w2, b2 = init_params(kp)

    out = jax.jit(vision_cnn_encoder)(x, w1, b1, w2, b2)
    out = jax.block_until_ready(out)

    ref = jax.block_until_ready(reference(x, w1, b1, w2, b2, VISION_VECTOR_SIZE))
    assert out.shape == (2, 32, 1, VISION_VECTOR_SIZE), out.shape
    # bf16 matmul/pool operands (f32 accumulation) -> bf16-appropriate tolerance
    assert np.allclose(np.asarray(out), np.asarray(ref), rtol=2e-2, atol=2e-2), (
        "mismatch vs reference")
    print("KERNEL_OK")
</pallas_src>

<mosaic_0001>
module attributes {stable_mosaic.version = 11 : i64} {
  func.func @_conv1_kernel(%arg0: i32, %arg1: memref<80x256xbf16, #tpu.memory_space<vmem>>, %arg2: memref<16x80xbf16, #tpu.memory_space<vmem>>, %arg3: memref<16x1xf32, #tpu.memory_space<vmem>>, %arg4: memref<16x256xbf16, #tpu.memory_space<vmem>>) attributes {dimension_semantics = [#tpu.dimension_semantics<parallel>], iteration_bounds = array<i64: 2>, scalar_prefetch = 0 : i64, scratch_operands = 0 : i64, tpu.core_type = #tpu.core_type<tc>, window_params = [{transform_indices = @transform_0, window_bounds = array<i64: 80, 256>}, {pipeline_mode = #tpu.pipeline_mode<synchronous>, transform_indices = @transform_1, window_bounds = array<i64: 16, 80>}, {pipeline_mode = #tpu.pipeline_mode<synchronous>, transform_indices = @transform_2, window_bounds = array<i64: 16, 1>}, {transform_indices = @transform_3, window_bounds = array<i64: 16, 256>}]} {
    %c0 = arith.constant 0 : index
    %c0_0 = arith.constant 0 : index
    %0 = vector.load %arg2[%c0, %c0_0] : memref<16x80xbf16, #tpu.memory_space<vmem>>, vector<16x80xbf16>
    %c0_1 = arith.constant 0 : index
    %c0_2 = arith.constant 0 : index
    %1 = vector.load %arg1[%c0_1, %c0_2] : memref<80x256xbf16, #tpu.memory_space<vmem>>, vector<80x256xbf16>
    %cst = arith.constant dense<0.000000e+00> : vector<16x256xf32>
    %2 = tpu.matmul %0, %1, %cst {dimension_numbers = #tpu.dot_dimension_numbers<[1], [0], [0], [1], [0, 0, 1, 1], [], []>} : vector<16x80xbf16>, vector<80x256xbf16>, vector<16x256xf32> -> vector<16x256xf32>
    %c0_3 = arith.constant 0 : index
    %c0_4 = arith.constant 0 : index
    %3 = vector.load %arg3[%c0_3, %c0_4] : memref<16x1xf32, #tpu.memory_space<vmem>>, vector<16x1xf32>
    %4 = vector.broadcast %3 : vector<16x1xf32> to vector<16x256xf32>
    %5 = arith.addf %2, %4 : vector<16x256xf32>
    %cst_5 = arith.constant 0.000000e+00 : f32
    %6 = vector.broadcast %cst_5 : f32 to vector<16x256xf32>
    %7 = arith.maximumf %5, %6 : vector<16x256xf32>
    %8 = arith.truncf %7 : vector<16x256xf32> to vector<16x256xbf16>
    %c0_6 = arith.constant 0 : index
    %c0_7 = arith.constant 0 : index
    %9 = vector.load %arg4[%c0_6, %c0_7] : memref<16x256xbf16, #tpu.memory_space<vmem>>, vector<16x256xbf16>
    tpu.vector_store %arg4[%c0_6, %c0_7], %8 {strides = array<i32>} : memref<16x256xbf16, #tpu.memory_space<vmem>>, vector<16x256xbf16>,
    return
  }
  func.func @transform_0(%arg0: i32) -> (i32, i32) {
    %c0_i32 = arith.constant 0 : i32
    %c0_i32_0 = arith.constant 0 : i32
    return %c0_i32, %arg0 : i32, i32
  }
  func.func @transform_1(%arg0: i32) -> (i32, i32) {
    %c0_i32 = arith.constant 0 : i32
    %c0_i32_0 = arith.constant 0 : i32
    %c0_i32_1 = arith.constant 0 : i32
    return %c0_i32, %c0_i32_0 : i32, i32
  }
  func.func @transform_2(%arg0: i32) -> (i32, i32) {
    %c0_i32 = arith.constant 0 : i32
    %c0_i32_0 = arith.constant 0 : i32
    %c0_i32_1 = arith.constant 0 : i32
    return %c0_i32, %c0_i32_0 : i32, i32
  }
  func.func @transform_3(%arg0: i32) -> (i32, i32) {
    %c0_i32 = arith.constant 0 : i32
    %c0_i32_0 = arith.constant 0 : i32
    return %c0_i32, %arg0 : i32, i32
  }
}

module attributes {stable_mosaic.version = 11 : i64} {
  func.func @_conv2_pool_kernel(%arg0: i32, %arg1: memref<400x512xbf16, #tpu.memory_space<vmem>>, %arg2: memref<32x400xbf16, #tpu.memory_space<vmem>>, %arg3: memref<32x1xf32, #tpu.memory_space<vmem>>, %arg4: memref<512x128xbf16, #tpu.memory_space<vmem>>, %arg5: memref<32x128xf32, #tpu.memory_space<vmem>>) attributes {dimension_semantics = [#tpu.dimension_semantics<parallel>], iteration_bounds = array<i64: 1>, scalar_prefetch = 0 : i64, scratch_operands = 0 : i64, tpu.core_type = #tpu.core_type<tc>, window_params = [{transform_indices = @transform_0, window_bounds = array<i64: 400, 512>}, {pipeline_mode = #tpu.pipeline_mode<synchronous>, transform_indices = @transform_1, window_bounds = array<i64: 32, 400>}, {pipeline_mode = #tpu.pipeline_mode<synchronous>, transform_indices = @transform_2, window_bounds = array<i64: 32, 1>}, {pipeline_mode = #tpu.pipeline_mode<synchronous>, transform_indices = @transform_3, window_bounds = array<i64: 512, 128>}, {transform_indices = @transform_4, window_bounds = array<i64: 32, 128>}]} {
    %c0 = arith.constant 0 : index
    %c0_0 = arith.constant 0 : index
    %0 = vector.load %arg2[%c0, %c0_0] : memref<32x400xbf16, #tpu.memory_space<vmem>>, vector<32x400xbf16>
    %c0_1 = arith.constant 0 : index
    %c0_2 = arith.constant 0 : index
    %1 = vector.load %arg1[%c0_1, %c0_2] : memref<400x512xbf16, #tpu.memory_space<vmem>>, vector<400x512xbf16>
    %cst = arith.constant dense<0.000000e+00> : vector<32x512xf32>
    %2 = tpu.matmul %0, %1, %cst {dimension_numbers = #tpu.dot_dimension_numbers<[1], [0], [0], [1], [0, 0, 1, 1], [], []>} : vector<32x400xbf16>, vector<400x512xbf16>, vector<32x512xf32> -> vector<32x512xf32>
    %c0_3 = arith.constant 0 : index
    %c0_4 = arith.constant 0 : index
    %3 = vector.load %arg3[%c0_3, %c0_4] : memref<32x1xf32, #tpu.memory_space<vmem>>, vector<32x1xf32>
    %4 = vector.broadcast %3 : vector<32x1xf32> to vector<32x512xf32>
    %5 = arith.addf %2, %4 : vector<32x512xf32>
    %cst_5 = arith.constant 0.000000e+00 : f32
    %6 = vector.broadcast %cst_5 : f32 to vector<32x512xf32>
    %7 = arith.maximumf %5, %6 : vector<32x512xf32>
    %8 = arith.truncf %7 : vector<32x512xf32> to vector<32x512xbf16>
    %c0_6 = arith.constant 0 : index
    %c0_7 = arith.constant 0 : index
    %9 = vector.load %arg4[%c0_6, %c0_7] : memref<512x128xbf16, #tpu.memory_space<vmem>>, vector<512x128xbf16>
    %cst_8 = arith.constant dense<0.000000e+00> : vector<32x128xf32>
    %10 = tpu.matmul %8, %9, %cst_8 {dimension_numbers = #tpu.dot_dimension_numbers<[1], [0], [0], [1], [0, 0, 1, 1], [], []>} : vector<32x512xbf16>, vector<512x128xbf16>, vector<32x128xf32> -> vector<32x128xf32>
    %c0_9 = arith.constant 0 : index
    %c0_10 = arith.constant 0 : index
    %11 = vector.load %arg5[%c0_9, %c0_10] : memref<32x128xf32, #tpu.memory_space<vmem>>, vector<32x128xf32>
    tpu.vector_store %arg5[%c0_9, %c0_10], %10 {strides = array<i32>} : memref<32x128xf32, #tpu.memory_space<vmem>>, vector<32x128xf32>,
    return
  }
  func.func @transform_0(%arg0: i32) -> (i32, i32) {
    %c0_i32 = arith.constant 0 : i32
    %c0_i32_0 = arith.constant 0 : i32
    return %c0_i32, %arg0 : i32, i32
  }
  func.func @transform_1(%arg0: i32) -> (i32, i32) {
    %c0_i32 = arith.constant 0 : i32
    %c0_i32_0 = arith.constant 0 : i32
    %c0_i32_1 = arith.constant 0 : i32
    return %c0_i32, %c0_i32_0 : i32, i32
  }
  func.func @transform_2(%arg0: i32) -> (i32, i32) {
    %c0_i32 = arith.constant 0 : i32
    %c0_i32_0 = arith.constant 0 : i32
    %c0_i32_1 = arith.constant 0 : i32
    return %c0_i32, %c0_i32_0 : i32, i32
  }
  func.func @transform_3(%arg0: i32) -> (i32, i32) {
    %c0_i32 = arith.constant 0 : i32
    %c0_i32_0 = arith.constant 0 : i32
    %c0_i32_1 = arith.constant 0 : i32
    return %c0_i32, %c0_i32_0 : i32, i32
  }
  func.func @transform_4(%arg0: i32) -> (i32, i32) {
    %c0_i32 = arith.constant 0 : i32
    %c0_i32_0 = arith.constant 0 : i32
    return %c0_i32, %arg0 : i32, i32
  }
}

</mosaic_0001>

<llo_original>
// kernel: vision_cnn_encoder.2
$region0: #{vision_cnn_encoder.2}
  #allocation0 [shape = 'u32[]', space=smem, size = 0x4, offset = 0x4, fixed_abs, tag = 'smem constant byte address 0x4 - core index']
  #allocation1 [shape = 'u32[144,128]{1,0:T(1,128)}', space=vmem, size = 0x12000, scoped, tag = 'internal scratch']
  %s0 = inlined_call_operand.vmem [shape: bf16[80,512], index: 0, kind: input, shape index: {}]
  %s1 = inlined_call_operand.vmem [shape: bf16[16,80], index: 1, kind: input, shape index: {}]
  %s2 = inlined_call_operand.vmem [shape: f32[16,1], index: 2, kind: input, shape index: {}]
  %s3 = inlined_call_operand.vmem [shape: bf16[16,512], index: 3, kind: output, shape index: {}]
  %s4 = sld [smem:[#allocation0]]
  $region117: #{vision_cnn_encoder.2} parent=0
    _
  %s6 = ssub.s32 1, %s4
  %s7 = scalar_select 0, %s6, %s4
  $region1: #{vision_cnn_encoder.2} parent=0
    #allocation2 [shape = 'u8[81920]{0}', space=vmem, size = 0x14000, scoped, tag = 'input window, operand 0']
    #allocation3 [shape = 'u8[16384]{0}', space=vmem, size = 0x4000, scoped, tag = 'output window, operand 0']
    loop: start=0, step=1, limit=4
    $region2: #{vision_cnn_encoder.2} parent=1 // loop_pre_header
      _
    $region3: #{vision_cnn_encoder.2} parent=1 // loop_header
      %s9 = sphi 0, %s13
      %p10 = scmp.ge.s32.totalorder %s9, 4
      %s19 = sphi 0, %s21
      %s22 = sphi 0, %s19
      %s23 = sphi 0, %s22
      %s39 = sphi 0, %s23
      %s43 = sphi 0, %s43
      %s45 = sphi 0, %s43
      %s46 = sphi 0, %s45
      %s60 = sphi 0, %s46
      %s64 = sphi 0, %s64
      %s66 = sphi 0, %s64
      %s67 = sphi 0, %s66
      %s81 = sphi 0, %s67
      %s87 = sphi 0, %s89
      %s90 = sphi 0, %s87
      %s91 = sphi 0, %s90
      %s107 = sphi 0, %s91
    $region4: #{vision_cnn_encoder.2} parent=1 // loop_header_branch
      %12 = sbr.rel (%p10) target = $region8
    $region5: #{vision_cnn_encoder.2} parent=1 // loop_body
      %s14 = ssub.s32 %s9, 1
      %s15 = ssub.s32 %s9, 2
      %s16 = sadd.s32 %s9, 1
      %s17 = ssub.s32 %s9, %s16
      %p18 = scmp.eq.s32.totalorder %s17, 0
      %s20 = sadd.s32 %s19, 1
      %s21 = scalar_select %p18, %s19, %s20
      %p24 = pneg %p18
      %p25 = scmp.eq.s32.totalorder %s9, 1
      %p26 = por %p24, %p25
      %p27 = scmp.ne.s32.totalorder %s19, %s22
      %p28 = scmp.eq.s32.totalorder %s9, 0
      %p29 = por %p27, %p28
      %p30 = scmp.ne.s32.totalorder %s19, %s22
      %p31 = scmp.eq.s32.totalorder %s14, 1
      %p32 = por %p30, %p31
      %p33 = scmp.ne.s32.totalorder %s22, %s23
      %p34 = scmp.eq.s32.totalorder %s14, 0
      %p35 = por %p33, %p34
      %p36 = scmp.ne.s32.totalorder %s22, %s23
      %p37 = scmp.eq.s32.totalorder %s15, 1
      %p38 = por %p36, %p37
      %p40 = scmp.ne.s32.totalorder %s23, %s39
      %p41 = scmp.eq.s32.totalorder %s15, 0
      %p42 = por %p40, %p41
      %s44 = sadd.s32 %s43, 1
      %p47 = scmp.eq.s32.totalorder %s9, 1
      %p48 = scmp.ne.s32.totalorder %s43, %s45
      %p49 = scmp.eq.s32.totalorder %s9, 0
      %p50 = por %p48, %p49
      %p51 = scmp.ne.s32.totalorder %s43, %s45
      %p52 = scmp.eq.s32.totalorder %s14, 1
      %p53 = por %p51, %p52
      %p54 = scmp.ne.s32.totalorder %s45, %s46
      %p55 = scmp.eq.s32.totalorder %s14, 0
      %p56 = por %p54, %p55
      %p57 = scmp.ne.s32.totalorder %s45, %s46
      %p58 = scmp.eq.s32.totalorder %s15, 1
      %p59 = por %p57, %p58
      %p61 = scmp.ne.s32.totalorder %s46, %s60
      %p62 = scmp.eq.s32.totalorder %s15, 0
      %p63 = por %p61, %p62
      %s65 = sadd.s32 %s64, 1
      %p68 = scmp.eq.s32.totalorder %s9, 1
      %p69 = scmp.ne.s32.totalorder %s64, %s66
      %p70 = scmp.eq.s32.totalorder %s9, 0
      %p71 = por %p69, %p70
      %p72 = scmp.ne.s32.totalorder %s64, %s66
      %p73 = scmp.eq.s32.totalorder %s14, 1
      %p74 = por %p72, %p73
      %p75 = scmp.ne.s32.totalorder %s66, %s67
      %p76 = scmp.eq.s32.totalorder %s14, 0
      %p77 = por %p75, %p76
      %p78 = scmp.ne.s32.totalorder %s66, %s67
      %p79 = scmp.eq.s32.totalorder %s15, 1
      %p80 = por %p78, %p79
      %p82 = scmp.ne.s32.totalorder %s67, %s81
      %p83 = scmp.eq.s32.totalorder %s15, 0
      %p84 = por %p82, %p83
      %s85 = ssub.s32 %s9, %s16
      %p86 = scmp.eq.s32.totalorder %s85, 0
      %s88 = sadd.s32 %s87, 1
      %s89 = scalar_select %p86, %s87, %s88
      %p92 = pneg %p86
      %p93 = scmp.eq.s32.totalorder %s9, 1
      %p94 = por %p92, %p93
      %p95 = scmp.ne.s32.totalorder %s87, %s90
      %p96 = scmp.eq.s32.totalorder %s9, 0
      %p97 = por %p95, %p96
      %p98 = scmp.ne.s32.totalorder %s87, %s90
      %p99 = scmp.eq.s32.totalorder %s14, 1
      %p100 = por %p98, %p99
      %p101 = scmp.ne.s32.totalorder %s90, %s91
      %p102 = scmp.eq.s32.totalorder %s14, 0
      %p103 = por %p101, %p102
      %p104 = scmp.ne.s32.totalorder %s90, %s91
      %p105 = scmp.eq.s32.totalorder %s15, 1
      %p106 = por %p104, %p105
      %p108 = scmp.ne.s32.totalorder %s91, %s107
      %p109 = scmp.eq.s32.totalorder %s15, 0
      %p110 = por %p108, %p109
      %p111 = scmp.le.s32.totalorder 1, %s9
      %p112 = scmp.lt.s32.totalorder %s9, 3
      %p113 = pnand %p111, %p112
      %p114 = pneg %p113
      // Predicated region
      $region9: #{vision_cnn_encoder.2} parent=5 // pred_check
        _
      $region10: #{vision_cnn_encoder.2} parent=5 // pred_check_branch
        %116 = sbr.rel (%p113) target = $region12
      $region11: #{vision_cnn_encoder.2} parent=5 // pred_region
        %s117 = ssub.s32 %s9, 1
        // Predicated region
        $region13: #{vision_cnn_encoder.2} parent=11 // pred_check
          %p118 = pneg %p56
        $region14: #{vision_cnn_encoder.2} parent=11 // pred_check_branch
          %120 = sbr.rel (%p118) target = $region16
        $region15: #{vision_cnn_encoder.2} parent=11 // pred_region
          _
        $region16: #{vision_cnn_encoder.2} parent=11 // pred_fallthru
          _
        // Predicated region
        $region17: #{vision_cnn_encoder.2} parent=11 // pred_check
          %p121 = pneg %p77
        $region18: #{vision_cnn_encoder.2} parent=11 // pred_check_branch
          %123 = sbr.rel (%p121) target = $region20
        $region19: #{vision_cnn_encoder.2} parent=11 // pred_region
          _
        $region20: #{vision_cnn_encoder.2} parent=11 // pred_fallthru
          _
      $region12: #{vision_cnn_encoder.2} parent=5 // pred_fallthru
        _
      %p124 = scmp.lt.s32.totalorder %s9, 2
      // Predicated region
      $region21: #{vision_cnn_encoder.2} parent=5 // pred_check
        %p125 = pneg %p124
      $region22: #{vision_cnn_encoder.2} parent=5 // pred_check_branch
        %127 = sbr.rel (%p125) target = $region24
      $region23: #{vision_cnn_encoder.2} parent=5 // pred_region
        // Predicated region
        $region25: #{vision_cnn_encoder.2} parent=23 // pred_check
          %p128 = pneg %p29
        $region26: #{vision_cnn_encoder.2} parent=23 // pred_check_branch
          %130 = sbr.rel (%p128) target = $region28
        $region27: #{vision_cnn_encoder.2} parent=23 // pred_region
          %s131 = sand.u32 %s19, 1
          %s132 = sand.u32 %s19, 1
          %s133 = smul.addr %s132, 80
          %s134 = scalar_lea.vmem [#allocation2], %s133
          %s135 = smul.u32 2, %s9
          %s136 = smul.addr %s135, 4
          %s137 = scalar_lea.vmem %s0, %s136
          // Predicated region
          $region29: #{vision_cnn_encoder.2} parent=27 // pred_check
            _
          $region30: #{vision_cnn_encoder.2} parent=27 // pred_check_branch
            %139 = sbr.rel (0) target = $region32
          $region31: #{vision_cnn_encoder.2} parent=27 // pred_region
            // Predicated region
            $region33: #{vision_cnn_encoder.2} parent=31 // pred_check
              _
            $region34: #{vision_cnn_encoder.2} parent=31 // pred_check_branch
              %141 = sbr.rel (0) target = $region36
            $region35: #{vision_cnn_encoder.2} parent=31 // pred_region
              // Predicated region
              $region48: #{vision_cnn_encoder.2} parent=35 // pred_check
                _
              $region49: #{vision_cnn_encoder.2} parent=35 // pred_check_branch
                %175 = sbr.rel (0) target = $region51
              $region50: #{vision_cnn_encoder.2} parent=35 // pred_region
                loop: start=0, step=1, limit=1
                $region52: #{vision_cnn_encoder.2} parent=50 // loop_pre_header
                  _
                $region53: #{vision_cnn_encoder.2} parent=50 // loop_header
                  %s177 = sphi 0, %s181
                  %p178 = scmp.ge.s32.totalorder %s177, 1
                  %s182 = sphi %s137, %s137
                  %s183 = sphi %s134, %s134
                $region54: #{vision_cnn_encoder.2} parent=50 // loop_header_branch
                  %180 = sbr.rel (%p178) target = $region58
                $region55: #{vision_cnn_encoder.2} parent=50 // loop_body
                  %v184 = vld [vmem:[%s182] sm:$0xff]
                  %185 = vst [vmem:[%s183] sm:$0xff] %v184
                  %v186 = vld [vmem:[%s182 + $0x10] sm:$0xff]
                  %187 = vst [vmem:[%s183 + $0x8] sm:$0xff] %v186
                  %v188 = vld [vmem:[%s182 + $0x20] sm:$0xff]
                  %189 = vst [vmem:[%s183 + $0x10] sm:$0xff] %v188
                  %v190 = vld [vmem:[%s182 + $0x30] sm:$0xff]
                  %191 = vst [vmem:[%s183 + $0x18] sm:$0xff] %v190
                  %v192 = vld [vmem:[%s182 + $0x40] sm:$0xff]
                  %193 = vst [vmem:[%s183 + $0x20] sm:$0xff] %v192
                  %v194 = vld [vmem:[%s182 + $0x50] sm:$0xff]
                  %195 = vst [vmem:[%s183 + $0x28] sm:$0xff] %v194
                  %v196 = vld [vmem:[%s182 + $0x60] sm:$0xff]
                  %197 = vst [vmem:[%s183 + $0x30] sm:$0xff] %v196
                  %v198 = vld [vmem:[%s182 + $0x70] sm:$0xff]
                  %199 = vst [vmem:[%s183 + $0x38] sm:$0xff] %v198
                  %v200 = vld [vmem:[%s182 + $0x80] sm:$0xff]
                  %201 = vst [vmem:[%s183 + $0x40] sm:$0xff] %v200
                  %v202 = vld [vmem:[%s182 + $0x90] sm:$0xff]
                  %203 = vst [vmem:[%s183 + $0x48] sm:$0xff] %v202
                $region56: #{vision_cnn_encoder.2} parent=50 // loop_footer
                  %s181 = sadd.s32 1, %s177
                $region57: #{vision_cnn_encoder.2} parent=50 // loop_footer_branch
                  %176 = sbr.rel target = $region53
                $region58: #{vision_cnn_encoder.2} parent=50 // loop_exit
                  _
              $region51: #{vision_cnn_encoder.2} parent=35 // pred_fallthru
                _
              // Predicated region
              $region59: #{vision_cnn_encoder.2} parent=35 // pred_check
                _
              $region60: #{vision_cnn_encoder.2} parent=35 // pred_check_branch
                %205 = sbr.rel target = $region62
              $region61: #{vision_cnn_encoder.2} parent=35 // pred_region
                _
              $region62: #{vision_cnn_encoder.2} parent=35 // pred_fallthru
                _
            $region36: #{vision_cnn_encoder.2} parent=31 // pred_fallthru
              _
            // Predicated region
            $region37: #{vision_cnn_encoder.2} parent=31 // pred_check
              _
            $region38: #{vision_cnn_encoder.2} parent=31 // pred_check_branch
              %143 = sbr.rel target = $region40
            $region39: #{vision_cnn_encoder.2} parent=31 // pred_region
              %s145 = ssub.s32 256, 1
              loop: start=0, step=1, limit=1
              $region41: #{vision_cnn_encoder.2} parent=39 // loop_pre_header
                _
              $region42: #{vision_cnn_encoder.2} parent=39 // loop_header
                %s147 = sphi 0, %s151
                %p148 = scmp.ge.s32.totalorder %s147, 1
                %s152 = sphi %s137, %s137
                %s153 = sphi %s134, %s134
              $region43: #{vision_cnn_encoder.2} parent=39 // loop_header_branch
                %150 = sbr.rel (%p148) target = $region47
              $region44: #{vision_cnn_encoder.2} parent=39 // loop_body
                %v154 = vld [vmem:[%s152] sm:%s145]
                %155 = vst [vmem:[%s153] sm:%s145] %v154
                %v156 = vld [vmem:[%s152 + $0x10] sm:%s145]
                %157 = vst [vmem:[%s153 + $0x8] sm:%s145] %v156
                %v158 = vld [vmem:[%s152 + $0x20] sm:%s145]
                %159 = vst [vmem:[%s153 + $0x10] sm:%s145] %v158
                %v160 = vld [vmem:[%s152 + $0x30] sm:%s145]
                %161 = vst [vmem:[%s153 + $0x18] sm:%s145] %v160
                %v162 = vld [vmem:[%s152 + $0x40] sm:%s145]
                %163 = vst [vmem:[%s153 + $0x20] sm:%s145] %v162
                %v164 = vld [vmem:[%s152 + $0x50] sm:%s145]
                %165 = vst [vmem:[%s153 + $0x28] sm:%s145] %v164
                %v166 = vld [vmem:[%s152 + $0x60] sm:%s145]
                %167 = vst [vmem:[%s153 + $0x30] sm:%s145] %v166
                %v168 = vld [vmem:[%s152 + $0x70] sm:%s145]
                %169 = vst [vmem:[%s153 + $0x38] sm:%s145] %v168
                %v170 = vld [vmem:[%s152 + $0x80] sm:%s145]
                %171 = vst [vmem:[%s153 + $0x40] sm:%s145] %v170
                %v172 = vld [vmem:[%s152 + $0x90] sm:%s145]
                %173 = vst [vmem:[%s153 + $0x48] sm:%s145] %v172
              $region45: #{vision_cnn_encoder.2} parent=39 // loop_footer
                %s151 = sadd.s32 1, %s147
              $region46: #{vision_cnn_encoder.2} parent=39 // loop_footer_branch
                %146 = sbr.rel target = $region42
              $region47: #{vision_cnn_encoder.2} parent=39 // loop_exit
                _
            $region40: #{vision_cnn_encoder.2} parent=31 // pred_fallthru
              _
          $region32: #{vision_cnn_encoder.2} parent=27 // pred_fallthru
            _
          %206 = vnop
        $region28: #{vision_cnn_encoder.2} parent=23 // pred_fallthru
          _
      $region24: #{vision_cnn_encoder.2} parent=5 // pred_fallthru
        _
      %p207 = scmp.le.s32.totalorder 1, %s9
      %p208 = scmp.lt.s32.totalorder %s9, 3
      %p209 = pnand %p207, %p208
      %p210 = pneg %p209
      // Predicated region
      $region63: #{vision_cnn_encoder.2} parent=5 // pred_check
        _
      $region64: #{vision_cnn_encoder.2} parent=5 // pred_check_branch
        %212 = sbr.rel (%p209) target = $region66
      $region65: #{vision_cnn_encoder.2} parent=5 // pred_region
        %s213 = ssub.s32 %s9, 1
        %s214 = sand.u32 %s22, 1
        %s215 = sand.u32 %s22, 1
        %s216 = smul.addr %s215, 80
        %s217 = scalar_lea.vmem [#allocation2], %s216
        // Predicated region
        $region67: #{vision_cnn_encoder.2} parent=65 // pred_check
          %p218 = pneg %p35
        $region68: #{vision_cnn_encoder.2} parent=65 // pred_check_branch
          %220 = sbr.rel (%p218) target = $region70
        $region69: #{vision_cnn_encoder.2} parent=65 // pred_region
          _
        $region70: #{vision_cnn_encoder.2} parent=65 // pred_fallthru
          _
        %s221 = sand.u32 %s22, 1
        %s222 = sand.u32 %s22, 1
        %s223 = smul.addr %s222, 80
        %s224 = scalar_lea.vmem [#allocation2], %s223
        %p225 = pneg %p35
        %p226 = pneg %p32
        %p227 = pneg %p56
        %p228 = pneg %p53
        %p229 = pneg %p77
        %p230 = pneg %p74
        %p231 = pneg %p103
        %p232 = pneg %p100
        %s233 = sand.u32 %s90, 1
        %s234 = sand.u32 %s90, 1
        %s235 = smul.addr %s234, 16
        %s236 = scalar_lea.vmem [#allocation3], %s235
        %s237 = smul.u32 2, %s14
        %s238 = smul.u32 2, %s14
        %v240 = vld [vmem:[%s1] sm:$0xf]
        %v241 = vld [vmem:[%s1 + $0x4] sm:$0xf]
        %v242 = vld [vmem:[%s217] sm:$0xff]
        %v243 = vld [vmem:[%s217 + $0x8] sm:$0xff]
        %v244 = vld [vmem:[%s217 + $0x10] sm:$0xff]
        %v245 = vld [vmem:[%s217 + $0x18] sm:$0xff]
        %v246 = vld [vmem:[%s217 + $0x20] sm:$0xff]
        %v247 = vld [vmem:[%s217 + $0x28] sm:$0xff]
        %v248 = vld [vmem:[%s217 + $0x30] sm:$0xff]
        %v249 = vld [vmem:[%s217 + $0x38] sm:$0xff]
        %v250 = vld [vmem:[%s217 + $0x40] sm:$0xff]
        %v251 = vld [vmem:[%s217 + $0x48] sm:$0xff]
        %v252 = vld [vmem:[%s2] sm:$0xff]
        %v253 = vld [vmem:[%s2 + $0x8] sm:$0xff]
        %255 = vset.pattern.permute.xlu0 0
        %256 = vperm.xlu0 %255, %v252
        %v257 = vpop.permute.xlu0 %256
        %260 = vset.pattern.permute.xlu0 0
        %261 = vperm.xlu0 %260, %v253
        %v262 = vpop.permute.xlu0 %261
        %v266 = vunpack.c.l.b16 %v240
        %v267 = vunpack.c.l.b16 %v241
        %v268 = vpack.c.b16 %v267, %v266
        %v279 = vunpack.c.l.b16 %v242
        %v280 = vunpack.c.h.b16 %v242
        %v281 = vunpack.c.l.b16 %v243
        %v282 = vunpack.c.h.b16 %v243
        %v283 = vunpack.c.l.b16 %v244
        %v284 = vunpack.c.h.b16 %v244
        %v285 = vunpack.c.l.b16 %v245
        %v286 = vunpack.c.h.b16 %v245
        %v287 = vunpack.c.l.b16 %v246
        %v288 = vunpack.c.h.b16 %v246
        %v289 = vunpack.c.l.b16 %v247
        %v290 = vunpack.c.h.b16 %v247
        %v291 = vunpack.c.l.b16 %v248
        %v292 = vunpack.c.h.b16 %v248
        %v293 = vunpack.c.l.b16 %v249
        %v294 = vunpack.c.h.b16 %v249
        %v295 = vunpack.c.l.b16 %v250
        %v296 = vunpack.c.h.b16 %v250
        %v297 = vunpack.c.l.b16 %v251
        %v298 = vunpack.c.h.b16 %v251
        %v299 = vpack.c.b16 %v281, %v279
        %v300 = vpack.c.b16 %v282, %v280
        %v301 = vpack.c.b16 %v285, %v283
        %v302 = vpack.c.b16 %v286, %v284
        %v303 = vpack.c.b16 %v289, %v287
        %v304 = vpack.c.b16 %v290, %v288
        %v305 = vpack.c.b16 %v293, %v291
        %v306 = vpack.c.b16 %v294, %v292
        %v307 = vpack.c.b16 %v297, %v295
        %v308 = vpack.c.b16 %v298, %v296
        %vm319 = vcmask 654336
        %v321 = vsel %vm319, %v268, 0
        %323 = vmatprep.subr.bf16.mxu0 0
        %324 = vmatpush1.bf16.msra.mxu0 0
        %325 = vmatprep.subr.bf16.mxu0 0
        %326 = vmatpush1.bf16.msra.mxu0 0
        %327 = vmatprep.subr.bf16.mxu0 0
        %328 = vmatpush1.bf16.msra.mxu0 0
        %329 = vmatprep.subr.bf16.mxu0 %v308
        %330 = vmatpush1.bf16.msra.mxu0 %v307
        %331 = vmatprep.subr.bf16.mxu0 %v306
        %332 = vmatpush1.bf16.msra.mxu0 %v305
        %333 = vmatprep.subr.bf16.mxu0 %v304
        %334 = vmatpush1.bf16.msra.mxu0 %v303
        %335 = vmatprep.subr.bf16.mxu0 %v302
        %336 = vmatpush1.bf16.msra.mxu0 %v301
        %337 = vmatprep.subr.bf16.mxu0 %v300
        %338 = vmatpush1.bf16.msra.mxu0 %v299
        %339 = vmatprep.subr.bf16.mxu0 0
        %340 = vmatpush2.bf16.msra.mxu0 0
        %341 = vmatprep.subr.bf16.mxu0 0
        %342 = vmatpush2.bf16.msra.mxu0 0
        %343 = vmatprep.subr.bf16.mxu0 0
        %344 = vmatpush2.bf16.msra.mxu0 0
        %345 = vmatprep.subr.bf16.mxu0 0
        %346 = vmatpush2.bf16.msra.mxu0 0
        %347 = vmatprep.subr.bf16.mxu0 0
        %348 = vmatpush2.bf16.msra.mxu0 0
        %349 = vmatprep.subr.bf16.mxu0 0
        %350 = vmatpush2.bf16.msra.mxu0 0
        %351 = vmatprep.subr.bf16.mxu0 0
        %352 = vmatpush2.bf16.msra.mxu0 0
        %353 = vmatprep.subr.bf16.mxu0 0
        %354 = vmatpush2.bf16.msra.mxu0 0
        %355 = vmatprep.mubr.bf16.mxu0 0
        %356 = vmatmul.mubr.bf16.gmra.mxu0 %v321
        %v357 = vpop.f32.mrf.mxu0
        %v358 = vadd.f32 %v257, %v357
        %v359 = vpop.f32.mrf.mxu0
        %v360 = vadd.f32 %v257, %v359
        %v361 = vpop.f32.mrf.mxu0
        %v362 = vadd.f32 %v262, %v361
        %v363 = vpop.f32.mrf.mxu0
        %v364 = vadd.f32 %v262, %v363
        %365 = vdwg.mxu0
        %v366 = vmax.f32 %v358, 0.0
        %v367 = vmax.f32 %v360, 0.0
        %v368 = vmax.f32 %v362, 0.0
        %v369 = vmax.f32 %v364, 0.0
        %v370 = vpack.c.bf16 %v368, %v366
        %v371 = vpack.c.bf16 %v369, %v367
        %v374 = vunpack.c.l.b16 %v370
        %v375 = vunpack.c.l.b16 %v371
        %v376 = vunpack.c.h.b16 %v370
        %v377 = vunpack.c.h.b16 %v371
        %v378 = vpack.c.b16 %v375, %v374
        %v379 = vpack.c.b16 %v377, %v376
        %382 = vst [vmem:[%s236] sm:$0xff] %v378
        %383 = vst [vmem:[%s236 + $0x8] sm:$0xff] %v379
        %s384 = sand.u32 %s90, 1
        %s385 = sand.u32 %s90, 1
        %s386 = smul.addr %s385, 16
        %s387 = scalar_lea.vmem [#allocation3], %s386
        // Predicated region
        $region71: #{vision_cnn_encoder.2} parent=65 // pred_check
          %p388 = pneg %p100
        $region72: #{vision_cnn_encoder.2} parent=65 // pred_check_branch
          %390 = sbr.rel (%p388) target = $region74
        $region73: #{vision_cnn_encoder.2} parent=65 // pred_region
          %s391 = smul.u32 2, %s14
          %s392 = smul.addr %s391, 4
          %s393 = scalar_lea.vmem %s3, %s392
          // Predicated region
          $region75: #{vision_cnn_encoder.2} parent=73 // pred_check
            _
          $region76: #{vision_cnn_encoder.2} parent=73 // pred_check_branch
            %395 = sbr.rel (0) target = $region78
          $region77: #{vision_cnn_encoder.2} parent=73 // pred_region
            // Predicated region
            $region79: #{vision_cnn_encoder.2} parent=77 // pred_check
              _
            $region80: #{vision_cnn_encoder.2} parent=77 // pred_check_branch
              %397 = sbr.rel (0) target = $region82
            $region81: #{vision_cnn_encoder.2} parent=77 // pred_region
              // Predicated region
              $region94: #{vision_cnn_encoder.2} parent=81 // pred_check
                _
              $region95: #{vision_cnn_encoder.2} parent=81 // pred_check_branch
                %415 = sbr.rel (0) target = $region97
              $region96: #{vision_cnn_encoder.2} parent=81 // pred_region
                loop: start=0, step=1, limit=1
                $region98: #{vision_cnn_encoder.2} parent=96 // loop_pre_header
                  _
                $region99: #{vision_cnn_encoder.2} parent=96 // loop_header
                  %s417 = sphi 0, %s421
                  %p418 = scmp.ge.s32.totalorder %s417, 1
                  %s422 = sphi %s387, %s387
                  %s423 = sphi %s393, %s393
                $region100: #{vision_cnn_encoder.2} parent=96 // loop_header_branch
                  %420 = sbr.rel (%p418) target = $region104
                $region101: #{vision_cnn_encoder.2} parent=96 // loop_body
                  %v424 = vld [vmem:[%s422] sm:$0xff]
                  %425 = vst [vmem:[%s423] sm:$0xff] %v424
                  %v426 = vld [vmem:[%s422 + $0x8] sm:$0xff]
                  %427 = vst [vmem:[%s423 + $0x10] sm:$0xff] %v426
                $region102: #{vision_cnn_encoder.2} parent=96 // loop_footer
                  %s421 = sadd.s32 1, %s417
                $region103: #{vision_cnn_encoder.2} parent=96 // loop_footer_branch
                  %416 = sbr.rel target = $region99
                $region104: #{vision_cnn_encoder.2} parent=96 // loop_exit
                  _
              $region97: #{vision_cnn_encoder.2} parent=81 // pred_fallthru
                _
              // Predicated region
              $region105: #{vision_cnn_encoder.2} parent=81 // pred_check
                _
              $region106: #{vision_cnn_encoder.2} parent=81 // pred_check_branch
                %429 = sbr.rel target = $region108
              $region107: #{vision_cnn_encoder.2} parent=81 // pred_region
                _
              $region108: #{vision_cnn_encoder.2} parent=81 // pred_fallthru
                _
            $region82: #{vision_cnn_encoder.2} parent=77 // pred_fallthru
              _
            // Predicated region
            $region83: #{vision_cnn_encoder.2} parent=77 // pred_check
              _
            $region84: #{vision_cnn_encoder.2} parent=77 // pred_check_branch
              %399 = sbr.rel target = $region86
            $region85: #{vision_cnn_encoder.2} parent=77 // pred_region
              %s401 = ssub.s32 256, 1
              loop: start=0, step=1, limit=1
              $region87: #{vision_cnn_encoder.2} parent=85 // loop_pre_header
                _
              $region88: #{vision_cnn_encoder.2} parent=85 // loop_header
                %s403 = sphi 0, %s407
                %p404 = scmp.ge.s32.totalorder %s403, 1
                %s408 = sphi %s387, %s387
                %s409 = sphi %s393, %s393
              $region89: #{vision_cnn_encoder.2} parent=85 // loop_header_branch
                %406 = sbr.rel (%p404) target = $region93
              $region90: #{vision_cnn_encoder.2} parent=85 // loop_body
                %v410 = vld [vmem:[%s408] sm:%s401]
                %411 = vst [vmem:[%s409] sm:%s401] %v410
                %v412 = vld [vmem:[%s408 + $0x8] sm:%s401]
                %413 = vst [vmem:[%s409 + $0x10] sm:%s401] %v412
              $region91: #{vision_cnn_encoder.2} parent=85 // loop_footer
                %s407 = sadd.s32 1, %s403
              $region92: #{vision_cnn_encoder.2} parent=85 // loop_footer_branch
                %402 = sbr.rel target = $region88
              $region93: #{vision_cnn_encoder.2} parent=85 // loop_exit
                _
            $region86: #{vision_cnn_encoder.2} parent=77 // pred_fallthru
              _
          $region78: #{vision_cnn_encoder.2} parent=73 // pred_fallthru
            _
          %430 = vnop
        $region74: #{vision_cnn_encoder.2} parent=65 // pred_fallthru
          _
      $region66: #{vision_cnn_encoder.2} parent=5 // pred_fallthru
        _
      %p431 = scmp.le.s32.totalorder 2, %s9
      // Predicated region
      $region109: #{vision_cnn_encoder.2} parent=5 // pred_check
        %p432 = pneg %p431
      $region110: #{vision_cnn_encoder.2} parent=5 // pred_check_branch
        %434 = sbr.rel (%p432) target = $region112
      $region111: #{vision_cnn_encoder.2} parent=5 // pred_region
        %s435 = ssub.s32 %s9, 2
        // Predicated region
        $region113: #{vision_cnn_encoder.2} parent=111 // pred_check
          %p436 = pneg %p106
        $region114: #{vision_cnn_encoder.2} parent=111 // pred_check_branch
          %438 = sbr.rel (%p436) target = $region116
        $region115: #{vision_cnn_encoder.2} parent=111 // pred_region
          %s439 = sand.u32 %s91, 1
          %s440 = sand.u32 %s91, 1
          %s441 = smul.addr %s440, 16
          %s442 = scalar_lea.vmem [#allocation3], %s441
        $region116: #{vision_cnn_encoder.2} parent=111 // pred_fallthru
          _
      $region112: #{vision_cnn_encoder.2} parent=5 // pred_fallthru
        _
    $region6: #{vision_cnn_encoder.2} parent=1 // loop_footer
      %s13 = sadd.s32 1, %s9
    $region7: #{vision_cnn_encoder.2} parent=1 // loop_footer_branch
      %8 = sbr.rel target = $region3
    $region8: #{vision_cnn_encoder.2} parent=1 // loop_exit
      _

// kernel: vision_cnn_encoder.3
$region0: #{vision_cnn_encoder.3}
  #allocation0 [shape = 'u32[]', space=smem, size = 0x4, offset = 0x4, fixed_abs, tag = 'smem constant byte address 0x4 - core index']
  #allocation1 [shape = 'u32[144,128]{1,0:T(1,128)}', space=vmem, size = 0x12000, scoped, tag = 'internal scratch']
  %s0 = inlined_call_operand.vmem [shape: bf16[400,512], index: 0, kind: input, shape index: {}]
  %s1 = inlined_call_operand.vmem [shape: bf16[32,400], index: 1, kind: input, shape index: {}]
  %s2 = inlined_call_operand.vmem [shape: f32[32,1], index: 2, kind: input, shape index: {}]
  %s3 = inlined_call_operand.vmem [shape: bf16[512,128], index: 3, kind: input, shape index: {}]
  %s4 = inlined_call_operand.vmem [shape: f32[32,128], index: 4, kind: output, shape index: {}]
  %s5 = sld [smem:[#allocation0]]
  $region26: #{vision_cnn_encoder.3} parent=0
    _
  %s7 = ssub.s32 1, %s5
  %s8 = scalar_select 0, %s7, %s5
  // Predicated region
  $region2: #{vision_cnn_encoder.3} parent=0 // pred_check
    _
  $region3: #{vision_cnn_encoder.3} parent=0 // pred_check_branch
    %10 = sbr.rel (0) target = $region5
  $region4: #{vision_cnn_encoder.3} parent=0 // pred_region
    _
  $region5: #{vision_cnn_encoder.3} parent=0 // pred_fallthru
    _
  // Predicated region
  $region6: #{vision_cnn_encoder.3} parent=0 // pred_check
    _
  $region7: #{vision_cnn_encoder.3} parent=0 // pred_check_branch
    %12 = sbr.rel (0) target = $region9
  $region8: #{vision_cnn_encoder.3} parent=0 // pred_region
    _
  $region9: #{vision_cnn_encoder.3} parent=0 // pred_fallthru
    _
  // Predicated region
  $region10: #{vision_cnn_encoder.3} parent=0 // pred_check
    _
  $region11: #{vision_cnn_encoder.3} parent=0 // pred_check_branch
    %14 = sbr.rel (0) target = $region13
  $region12: #{vision_cnn_encoder.3} parent=0 // pred_region
    _
  $region13: #{vision_cnn_encoder.3} parent=0 // pred_fallthru
    _
  // Predicated region
  $region14: #{vision_cnn_encoder.3} parent=0 // pred_check
    _
  $region15: #{vision_cnn_encoder.3} parent=0 // pred_check_branch
    %16 = sbr.rel (0) target = $region17
  $region16: #{vision_cnn_encoder.3} parent=0 // pred_region
    _
  $region17: #{vision_cnn_encoder.3} parent=0 // pred_fallthru
    _
  %v18 = vld [vmem:[%s1] sm:$0xff]
  %v19 = vld [vmem:[%s1 + $0x8] sm:$0xff]
  %v20 = vld [vmem:[%s1 + $0x10] sm:$0xff]
  %v21 = vld [vmem:[%s1 + $0x18] sm:$0xff]
  %v22 = vld [vmem:[%s1 + $0x20] sm:$0xff]
  %v23 = vld [vmem:[%s1 + $0x28] sm:$0xff]
  %v24 = vld [vmem:[%s1 + $0x30] sm:$0xff]
  %v25 = vld [vmem:[%s1 + $0x38] sm:$0xff]
  %v26 = vld [vmem:[%s0] sm:$0xff]
  %v27 = vld [vmem:[%s0 + $0x8] sm:$0xff]
  %v28 = vld [vmem:[%s0 + $0x10] sm:$0xff]
  %v29 = vld [vmem:[%s0 + $0x18] sm:$0xff]
  %v30 = vld [vmem:[%s0 + $0x20] sm:$0xff]
  %v31 = vld [vmem:[%s0 + $0x28] sm:$0xff]
  %v32 = vld [vmem:[%s0 + $0x30] sm:$0xff]
  %v33 = vld [vmem:[%s0 + $0x38] sm:$0xff]
  %v34 = vld [vmem:[%s0 + $0x40] sm:$0xff]
  %v35 = vld [vmem:[%s0 + $0x48] sm:$0xff]
  %v36 = vld [vmem:[%s0 + $0x50] sm:$0xff]
  %v37 = vld [vmem:[%s0 + $0x58] sm:$0xff]
  %v38 = vld [vmem:[%s0 + $0x60] sm:$0xff]
  %v39 = vld [vmem:[%s0 + $0x68] sm:$0xff]
  %v40 = vld [vmem:[%s0 + $0x70] sm:$0xff]
  %v41 = vld [vmem:[%s0 + $0x78] sm:$0xff]
  %v42 = vld [vmem:[%s0 + $0x80] sm:$0xff]
  %v43 = vld [vmem:[%s0 + $0x88] sm:$0xff]
  %v44 = vld [vmem:[%s0 + $0x90] sm:$0xff]
  %v45 = vld [vmem:[%s0 + $0x98] sm:$0xff]
  %v46 = vld [vmem:[%s0 + $0xa0] sm:$0xff]
  %v47 = vld [vmem:[%s0 + $0xa8] sm:$0xff]
  %v48 = vld [vmem:[%s0 + $0xb0] sm:$0xff]
  %v49 = vld [vmem:[%s0 + $0xb8] sm:$0xff]
  %v50 = vld [vmem:[%s0 + $0xc0] sm:$0xff]
  %v51 = vld [vmem:[%s0 + $0xc8] sm:$0xff]
  %v52 = vld [vmem:[%s0 + $0xd0] sm:$0xff]
  %v53 = vld [vmem:[%s0 + $0xd8] sm:$0xff]
  %v54 = vld [vmem:[%s0 + $0xe0] sm:$0xff]
  %v55 = vld [vmem:[%s0 + $0xe8] sm:$0xff]
  %v56 = vld [vmem:[%s0 + $0xf0] sm:$0xff]
  %v57 = vld [vmem:[%s0 + $0xf8] sm:$0xff]
  %v58 = vld [vmem:[%s0 + $0x100] sm:$0xff]
  %v59 = vld [vmem:[%s0 + $0x108] sm:$0xff]
  %v60 = vld [vmem:[%s0 + $0x110] sm:$0xff]
  %v61 = vld [vmem:[%s0 + $0x118] sm:$0xff]
  %v62 = vld [vmem:[%s0 + $0x120] sm:$0xff]
  %v63 = vld [vmem:[%s0 + $0x128] sm:$0xff]
  %v64 = vld [vmem:[%s0 + $0x130] sm:$0xff]
  %v65 = vld [vmem:[%s0 + $0x138] sm:$0xff]
  %v66 = vld [vmem:[%s0 + $0x140] sm:$0xff]
  %v67 = vld [vmem:[%s0 + $0x148] sm:$0xff]
  %v68 = vld [vmem:[%s0 + $0x150] sm:$0xff]
  %v69 = vld [vmem:[%s0 + $0x158] sm:$0xff]
  %v70 = vld [vmem:[%s0 + $0x160] sm:$0xff]
  %v71 = vld [vmem:[%s0 + $0x168] sm:$0xff]
  %v72 = vld [vmem:[%s0 + $0x170] sm:$0xff]
  %v73 = vld [vmem:[%s0 + $0x178] sm:$0xff]
  %v74 = vld [vmem:[%s0 + $0x180] sm:$0xff]
  %v75 = vld [vmem:[%s0 + $0x188] sm:$0xff]
  %v76 = vld [vmem:[%s0 + $0x190] sm:$0xff]
  %v77 = vld [vmem:[%s0 + $0x198] sm:$0xff]
  %v78 = vld [vmem:[%s0 + $0x1a0] sm:$0xff]
  %v79 = vld [vmem:[%s0 + $0x1a8] sm:$0xff]
  %v80 = vld [vmem:[%s0 + $0x1b0] sm:$0xff]
  %v81 = vld [vmem:[%s0 + $0x1b8] sm:$0xff]
  %v82 = vld [vmem:[%s0 + $0x1c0] sm:$0xff]
  %v83 = vld [vmem:[%s0 + $0x1c8] sm:$0xff]
  %v84 = vld [vmem:[%s0 + $0x1d0] sm:$0xff]
  %v85 = vld [vmem:[%s0 + $0x1d8] sm:$0xff]
  %v86 = vld [vmem:[%s0 + $0x1e0] sm:$0xff]
  %v87 = vld [vmem:[%s0 + $0x1e8] sm:$0xff]
  %v88 = vld [vmem:[%s0 + $0x1f0] sm:$0xff]
  %v89 = vld [vmem:[%s0 + $0x1f8] sm:$0xff]
  %v90 = vld [vmem:[%s0 + $0x200] sm:$0xff]
  %v91 = vld [vmem:[%s0 + $0x208] sm:$0xff]
  %v92 = vld [vmem:[%s0 + $0x210] sm:$0xff]
  %v93 = vld [vmem:[%s0 + $0x218] sm:$0xff]
  %v94 = vld [vmem:[%s0 + $0x220] sm:$0xff]
  %v95 = vld [vmem:[%s0 + $0x228] sm:$0xff]
  %v96 = vld [vmem:[%s0 + $0x230] sm:$0xff]
  %v97 = vld [vmem:[%s0 + $0x238] sm:$0xff]
  %v98 = vld [vmem:[%s0 + $0x240] sm:$0xff]
  %v99 = vld [vmem:[%s0 + $0x248] sm:$0xff]
  %v100 = vld [vmem:[%s0 + $0x250] sm:$0xff]
  %v101 = vld [vmem:[%s0 + $0x258] sm:$0xff]
  %v102 = vld [vmem:[%s0 + $0x260] sm:$0xff]
  %v103 = vld [vmem:[%s0 + $0x268] sm:$0xff]
  %v104 = vld [vmem:[%s0 + $0x270] sm:$0xff]
  %v105 = vld [vmem:[%s0 + $0x278] sm:$0xff]
  %v106 = vld [vmem:[%s0 + $0x280] sm:$0xff]
  %v107 = vld [vmem:[%s0 + $0x288] sm:$0xff]
  %v108 = vld [vmem:[%s0 + $0x290] sm:$0xff]
  %v109 = vld [vmem:[%s0 + $0x298] sm:$0xff]
  %v110 = vld [vmem:[%s0 + $0x2a0] sm:$0xff]
  %v111 = vld [vmem:[%s0 + $0x2a8] sm:$0xff]
  %v112 = vld [vmem:[%s0 + $0x2b0] sm:$0xff]
  %v113 = vld [vmem:[%s0 + $0x2b8] sm:$0xff]
  %v114 = vld [vmem:[%s0 + $0x2c0] sm:$0xff]
  %v115 = vld [vmem:[%s0 + $0x2c8] sm:$0xff]
  %v116 = vld [vmem:[%s0 + $0x2d0] sm:$0xff]
  %v117 = vld [vmem:[%s0 + $0x2d8] sm:$0xff]
  %v118 = vld [vmem:[%s0 + $0x2e0] sm:$0xff]
  %v119 = vld [vmem:[%s0 + $0x2e8] sm:$0xff]
  %v120 = vld [vmem:[%s0 + $0x2f0] sm:$0xff]
  %v121 = vld [vmem:[%s0 + $0x2f8] sm:$0xff]
  %v122 = vld [vmem:[%s0 + $0x300] sm:$0xff]
  %v123 = vld [vmem:[%s0 + $0x308] sm:$0xff]
  %v124 = vld [vmem:[%s0 + $0x310] sm:$0xff]
  %v125 = vld [vmem:[%s0 + $0x318] sm:$0xff]
  %v126 = vld [vmem:[%s2] sm:$0xff]
  %v127 = vld [vmem:[%s2 + $0x8] sm:$0xff]
  %v128 = vld [vmem:[%s2 + $0x10] sm:$0xff]
  %v129 = vld [vmem:[%s2 + $0x18] sm:$0xff]
  %131 = vset.pattern.permute.xlu0 0
  %132 = vperm.xlu0 %131, %v126
  %v133 = vpop.permute.xlu0 %132
  %136 = vset.pattern.permute.xlu0 0
  %137 = vperm.xlu0 %136, %v127
  %v138 = vpop.permute.xlu0 %137
  %141 = vset.pattern.permute.xlu0 0
  %142 = vperm.xlu0 %141, %v128
  %v143 = vpop.permute.xlu0 %142
  %146 = vset.pattern.permute.xlu0 0
  %147 = vperm.xlu0 %146, %v129
  %v148 = vpop.permute.xlu0 %147
  %v158 = vunpack.c.l.b16 %v18
  %v159 = vunpack.c.h.b16 %v18
  %v160 = vunpack.c.l.b16 %v19
  %v161 = vunpack.c.h.b16 %v19
  %v162 = vunpack.c.l.b16 %v20
  %v163 = vunpack.c.h.b16 %v20
  %v164 = vunpack.c.l.b16 %v21
  %v165 = vunpack.c.h.b16 %v21
  %v166 = vunpack.c.l.b16 %v22
  %v167 = vunpack.c.h.b16 %v22
  %v168 = vunpack.c.l.b16 %v23
  %v169 = vunpack.c.h.b16 %v23
  %v170 = vunpack.c.l.b16 %v24
  %v171 = vunpack.c.h.b16 %v24
  %v172 = vunpack.c.l.b16 %v25
  %v173 = vunpack.c.h.b16 %v25
  %v174 = vpack.c.b16 %v162, %v158
  %v175 = vpack.c.b16 %v163, %v159
  %v176 = vpack.c.b16 %v164, %v160
  %v177 = vpack.c.b16 %v165, %v161
  %v178 = vpack.c.b16 %v170, %v166
  %v179 = vpack.c.b16 %v171, %v167
  %v180 = vpack.c.b16 %v172, %v168
  %v181 = vpack.c.b16 %v173, %v169
  %v288 = vunpack.c.l.b16 %v26
  %v289 = vunpack.c.h.b16 %v26
  %v290 = vunpack.c.l.b16 %v27
  %v291 = vunpack.c.h.b16 %v27
  %v292 = vunpack.c.l.b16 %v28
  %v293 = vunpack.c.h.b16 %v28
  %v294 = vunpack.c.l.b16 %v29
  %v295 = vunpack.c.h.b16 %v29
  %v296 = vunpack.c.l.b16 %v30
  %v297 = vunpack.c.h.b16 %v30
  %v298 = vunpack.c.l.b16 %v31
  %v299 = vunpack.c.h.b16 %v31
  %v300 = vunpack.c.l.b16 %v32
  %v301 = vunpack.c.h.b16 %v32
  %v302 = vunpack.c.l.b16 %v33
  %v303 = vunpack.c.h.b16 %v33
  %v304 = vunpack.c.l.b16 %v34
  %v305 = vunpack.c.h.b16 %v34
  %v306 = vunpack.c.l.b16 %v35
  %v307 = vunpack.c.h.b16 %v35
  %v308 = vunpack.c.l.b16 %v36
  %v309 = vunpack.c.h.b16 %v36
  %v310 = vunpack.c.l.b16 %v37
  %v311 = vunpack.c.h.b16 %v37
  %v312 = vunpack.c.l.b16 %v38
  %v313 = vunpack.c.h.b16 %v38
  %v314 = vunpack.c.l.b16 %v39
  %v315 = vunpack.c.h.b16 %v39
  %v316 = vunpack.c.l.b16 %v40
  %v317 = vunpack.c.h.b16 %v40
  %v318 = vunpack.c.l.b16 %v41
  %v319 = vunpack.c.h.b16 %v41
  %v320 = vunpack.c.l.b16 %v42
  %v321 = vunpack.c.h.b16 %v42
  %v322 = vunpack.c.l.b16 %v43
  %v323 = vunpack.c.h.b16 %v43
  %v324 = vunpack.c.l.b16 %v44
  %v325 = vunpack.c.h.b16 %v44
  %v326 = vunpack.c.l.b16 %v45
  %v327 = vunpack.c.h.b16 %v45
  %v328 = vunpack.c.l.b16 %v46
  %v329 = vunpack.c.h.b16 %v46
  %v330 = vunpack.c.l.b16 %v47
  %v331 = vunpack.c.h.b16 %v47
  %v332 = vunpack.c.l.b16 %v48
  %v333 = vunpack.c.h.b16 %v48
  %v334 = vunpack.c.l.b16 %v49
  %v335 = vunpack.c.h.b16 %v49
  %v336 = vunpack.c.l.b16 %v50
  %v337 = vunpack.c.h.b16 %v50
  %v338 = vunpack.c.l.b16 %v51
  %v339 = vunpack.c.h.b16 %v51
  %v340 = vunpack.c.l.b16 %v52
  %v341 = vunpack.c.h.b16 %v52
  %v342 = vunpack.c.l.b16 %v53
  %v343 = vunpack.c.h.b16 %v53
  %v344 = vunpack.c.l.b16 %v54
  %v345 = vunpack.c.h.b16 %v54
  %v346 = vunpack.c.l.b16 %v55
  %v347 = vunpack.c.h.b16 %v55
  %v348 = vunpack.c.l.b16 %v56
  %v349 = vunpack.c.h.b16 %v56
  %v350 = vunpack.c.l.b16 %v57
  %v351 = vunpack.c.h.b16 %v57
  %v352 = vunpack.c.l.b16 %v58
  %v353 = vunpack.c.h.b16 %v58
  %v354 = vunpack.c.l.b16 %v59
  %v355 = vunpack.c.h.b16 %v59
  %v356 = vunpack.c.l.b16 %v60
  %v357 = vunpack.c.h.b16 %v60
  %v358 = vunpack.c.l.b16 %v61
  %v359 = vunpack.c.h.b16 %v61
  %v360 = vunpack.c.l.b16 %v62
  %v361 = vunpack.c.h.b16 %v62
  %v362 = vunpack.c.l.b16 %v63
  %v363 = vunpack.c.h.b16 %v63
  %v364 = vunpack.c.l.b16 %v64
  %v365 = vunpack.c.h.b16 %v64
  %v366 = vunpack.c.l.b16 %v65
  %v367 = vunpack.c.h.b16 %v65
  %v368 = vunpack.c.l.b16 %v66
  %v369 = vunpack.c.h.b16 %v66
  %v370 = vunpack.c.l.b16 %v67
  %v371 = vunpack.c.h.b16 %v67
  %v372 = vunpack.c.l.b16 %v68
  %v373 = vunpack.c.h.b16 %v68
  %v374 = vunpack.c.l.b16 %v69
  %v375 = vunpack.c.h.b16 %v69
  %v376 = vunpack.c.l.b16 %v70
  %v377 = vunpack.c.h.b16 %v70
  %v378 = vunpack.c.l.b16 %v71
  %v379 = vunpack.c.h.b16 %v71
  %v380 = vunpack.c.l.b16 %v72
  %v381 = vunpack.c.h.b16 %v72
  %v382 = vunpack.c.l.b16 %v73
  %v383 = vunpack.c.h.b16 %v73
  %v384 = vunpack.c.l.b16 %v74
  %v385 = vunpack.c.h.b16 %v74
  %v386 = vunpack.c.l.b16 %v75
  %v387 = vunpack.c.h.b16 %v75
  %v388 = vunpack.c.l.b16 %v76
  %v389 = vunpack.c.h.b16 %v76
  %v390 = vunpack.c.l.b16 %v77
  %v391 = vunpack.c.h.b16 %v77
  %v392 = vunpack.c.l.b16 %v78
  %v393 = vunpack.c.h.b16 %v78
  %v394 = vunpack.c.l.b16 %v79
  %v395 = vunpack.c.h.b16 %v79
  %v396 = vunpack.c.l.b16 %v80
  %v397 = vunpack.c.h.b16 %v80
  %v398 = vunpack.c.l.b16 %v81
  %v399 = vunpack.c.h.b16 %v81
  %v400 = vunpack.c.l.b16 %v82
  %v401 = vunpack.c.h.b16 %v82
  %v402 = vunpack.c.l.b16 %v83
  %v403 = vunpack.c.h.b16 %v83
  %v404 = vunpack.c.l.b16 %v84
  %v405 = vunpack.c.h.b16 %v84
  %v406 = vunpack.c.l.b16 %v85
  %v407 = vunpack.c.h.b16 %v85
  %v408 = vunpack.c.l.b16 %v86
  %v409 = vunpack.c.h.b16 %v86
  %v410 = vunpack.c.l.b16 %v87
  %v411 = vunpack.c.h.b16 %v87
  %v412 = vunpack.c.l.b16 %v88
  %v413 = vunpack.c.h.b16 %v88
  %v414 = vunpack.c.l.b16 %v89
  %v415 = vunpack.c.h.b16 %v89
  %v416 = vunpack.c.l.b16 %v90
  %v417 = vunpack.c.h.b16 %v90
  %v418 = vunpack.c.l.b16 %v91
  %v419 = vunpack.c.h.b16 %v91
  %v420 = vunpack.c.l.b16 %v92
  %v421 = vunpack.c.h.b16 %v92
  %v422 = vunpack.c.l.b16 %v93
  %v423 = vunpack.c.h.b16 %v93
  %v424 = vunpack.c.l.b16 %v94
  %v425 = vunpack.c.h.b16 %v94
  %v426 = vunpack.c.l.b16 %v95
  %v427 = vunpack.c.h.b16 %v95
  %v428 = vunpack.c.l.b16 %v96
  %v429 = vunpack.c.h.b16 %v96
  %v430 = vunpack.c.l.b16 %v97
  %v431 = vunpack.c.h.b16 %v97
  %v432 = vunpack.c.l.b16 %v98
  %v433 = vunpack.c.h.b16 %v98
  %v434 = vunpack.c.l.b16 %v99
  %v435 = vunpack.c.h.b16 %v99
  %v436 = vunpack.c.l.b16 %v100
  %v437 = vunpack.c.h.b16 %v100
  %v438 = vunpack.c.l.b16 %v101
  %v439 = vunpack.c.h.b16 %v101
  %v440 = vunpack.c.l.b16 %v102
  %v441 = vunpack.c.h.b16 %v102
  %v442 = vunpack.c.l.b16 %v103
  %v443 = vunpack.c.h.b16 %v103
  %v444 = vunpack.c.l.b16 %v104
  %v445 = vunpack.c.h.b16 %v104
  %v446 = vunpack.c.l.b16 %v105
  %v447 = vunpack.c.h.b16 %v105
  %v448 = vunpack.c.l.b16 %v106
  %v449 = vunpack.c.h.b16 %v106
  %v450 = vunpack.c.l.b16 %v107
  %v451 = vunpack.c.h.b16 %v107
  %v452 = vunpack.c.l.b16 %v108
  %v453 = vunpack.c.h.b16 %v108
  %v454 = vunpack.c.l.b16 %v109
  %v455 = vunpack.c.h.b16 %v109
  %v456 = vunpack.c.l.b16 %v110
  %v457 = vunpack.c.h.b16 %v110
  %v458 = vunpack.c.l.b16 %v111
  %v459 = vunpack.c.h.b16 %v111
  %v460 = vunpack.c.l.b16 %v112
  %v461 = vunpack.c.h.b16 %v112
  %v462 = vunpack.c.l.b16 %v113
  %v463 = vunpack.c.h.b16 %v113
  %v464 = vunpack.c.l.b16 %v114
  %v465 = vunpack.c.h.b16 %v114
  %v466 = vunpack.c.l.b16 %v115
  %v467 = vunpack.c.h.b16 %v115
  %v468 = vunpack.c.l.b16 %v116
  %v469 = vunpack.c.h.b16 %v116
  %v470 = vunpack.c.l.b16 %v117
  %v471 = vunpack.c.h.b16 %v117
  %v472 = vunpack.c.l.b16 %v118
  %v473 = vunpack.c.h.b16 %v118
  %v474 = vunpack.c.l.b16 %v119
  %v475 = vunpack.c.h.b16 %v119
  %v476 = vunpack.c.l.b16 %v120
  %v477 = vunpack.c.h.b16 %v120
  %v478 = vunpack.c.l.b16 %v121
  %v479 = vunpack.c.h.b16 %v121
  %v480 = vunpack.c.l.b16 %v122
  %v481 = vunpack.c.h.b16 %v122
  %v482 = vunpack.c.l.b16 %v123
  %v483 = vunpack.c.h.b16 %v123
  %v484 = vunpack.c.l.b16 %v124
  %v485 = vunpack.c.h.b16 %v124
  %v486 = vunpack.c.l.b16 %v125
  %v487 = vunpack.c.h.b16 %v125
  %v488 = vpack.c.b16 %v292, %v288
  %v489 = vpack.c.b16 %v293, %v289
  %v490 = vpack.c.b16 %v294, %v290
  %v491 = vpack.c.b16 %v295, %v291
  %v492 = vpack.c.b16 %v300, %v296
  %v493 = vpack.c.b16 %v301, %v297
  %v494 = vpack.c.b16 %v302, %v298
  %v495 = vpack.c.b16 %v303, %v299
  %v496 = vpack.c.b16 %v308, %v304
  %v497 = vpack.c.b16 %v309, %v305
  %v498 = vpack.c.b16 %v310, %v306
  %v499 = vpack.c.b16 %v311, %v307
  %v500 = vpack.c.b16 %v316, %v312
  %v501 = vpack.c.b16 %v317, %v313
  %v502 = vpack.c.b16 %v318, %v314
  %v503 = vpack.c.b16 %v319, %v315
  %v504 = vpack.c.b16 %v324, %v320
  %v505 = vpack.c.b16 %v325, %v321
  %v506 = vpack.c.b16 %v326, %v322
  %v507 = vpack.c.b16 %v327, %v323
  %v508 = vpack.c.b16 %v332, %v328
  %v509 = vpack.c.b16 %v333, %v329
  %v510 = vpack.c.b16 %v334, %v330
  %v511 = vpack.c.b16 %v335, %v331
  %v512 = vpack.c.b16 %v340, %v336
  %v513 = vpack.c.b16 %v341, %v337
  %v514 = vpack.c.b16 %v342, %v338
  %v515 = vpack.c.b16 %v343, %v339
  %v516 = vpack.c.b16 %v348, %v344
  %v517 = vpack.c.b16 %v349, %v345
  %v518 = vpack.c.b16 %v350, %v346
  %v519 = vpack.c.b16 %v351, %v347
  %v520 = vpack.c.b16 %v356, %v352
  %v521 = vpack.c.b16 %v357, %v353
  %v522 = vpack.c.b16 %v358, %v354
  %v523 = vpack.c.b16 %v359, %v355
  %v524 = vpack.c.b16 %v364, %v360
  %v525 = vpack.c.b16 %v365, %v361
  %v526 = vpack.c.b16 %v366, %v362
  %v527 = vpack.c.b16 %v367, %v363
  %v528 = vpack.c.b16 %v372, %v368
  %v529 = vpack.c.b16 %v373, %v369
  %v530 = vpack.c.b16 %v374, %v370
  %v531 = vpack.c.b16 %v375, %v371
  %v532 = vpack.c.b16 %v380, %v376
  %v533 = vpack.c.b16 %v381, %v377
  %v534 = vpack.c.b16 %v382, %v378
  %v535 = vpack.c.b16 %v383, %v379
  %v536 = vpack.c.b16 %v388, %v384
  %v537 = vpack.c.b16 %v389, %v385
  %v538 = vpack.c.b16 %v390, %v386
  %v539 = vpack.c.b16 %v391, %v387
  %v540 = vpack.c.b16 %v396, %v392
  %v541 = vpack.c.b16 %v397, %v393
  %v542 = vpack.c.b16 %v398, %v394
  %v543 = vpack.c.b16 %v399, %v395
  %v544 = vpack.c.b16 %v404, %v400
  %v545 = vpack.c.b16 %v405, %v401
  %v546 = vpack.c.b16 %v406, %v402
  %v547 = vpack.c.b16 %v407, %v403
  %v548 = vpack.c.b16 %v412, %v408
  %v549 = vpack.c.b16 %v413, %v409
  %v550 = vpack.c.b16 %v414, %v410
  %v551 = vpack.c.b16 %v415, %v411
  %v552 = vpack.c.b16 %v420, %v416
  %v553 = vpack.c.b16 %v421, %v417
  %v554 = vpack.c.b16 %v422, %v418
  %v555 = vpack.c.b16 %v423, %v419
  %v556 = vpack.c.b16 %v428, %v424
  %v557 = vpack.c.b16 %v429, %v425
  %v558 = vpack.c.b16 %v430, %v426
  %v559 = vpack.c.b16 %v431, %v427
  %v560 = vpack.c.b16 %v436, %v432
  %v561 = vpack.c.b16 %v437, %v433
  %v562 = vpack.c.b16 %v438, %v434
  %v563 = vpack.c.b16 %v439, %v435
  %v564 = vpack.c.b16 %v444, %v440
  %v565 = vpack.c.b16 %v445, %v441
  %v566 = vpack.c.b16 %v446, %v442
  %v567 = vpack.c.b16 %v447, %v443
  %v568 = vpack.c.b16 %v452, %v448
  %v569 = vpack.c.b16 %v453, %v449
  %v570 = vpack.c.b16 %v454, %v450
  %v571 = vpack.c.b16 %v455, %v451
  %v572 = vpack.c.b16 %v460, %v456
  %v573 = vpack.c.b16 %v461, %v457
  %v574 = vpack.c.b16 %v462, %v458
  %v575 = vpack.c.b16 %v463, %v459
  %v576 = vpack.c.b16 %v468, %v464
  %v577 = vpack.c.b16 %v469, %v465
  %v578 = vpack.c.b16 %v470, %v466
  %v579 = vpack.c.b16 %v471, %v467
  %v580 = vpack.c.b16 %v476, %v472
  %v581 = vpack.c.b16 %v477, %v473
  %v582 = vpack.c.b16 %v478, %v474
  %v583 = vpack.c.b16 %v479, %v475
  %v584 = vpack.c.b16 %v484, %v480
  %v585 = vpack.c.b16 %v485, %v481
  %v586 = vpack.c.b16 %v486, %v482
  %v587 = vpack.c.b16 %v487, %v483
  %vm688 = vcmask 130048
  %v690 = vsel %vm688, %v177, 0
  %v693 = vsel %vm688, %v181, 0
  %695 = vmatprep.subr.bf16.mxu0 %v517
  %696 = vmatpush1.bf16.msra.mxu0 %v516
  %697 = vmatprep.subr.bf16.mxu0 %v513
  %698 = vmatpush1.bf16.msra.mxu0 %v512
  %699 = vmatprep.subr.bf16.mxu0 %v509
  %700 = vmatpush1.bf16.msra.mxu0 %v508
  %701 = vmatprep.subr.bf16.mxu0 %v505
  %702 = vmatpush1.bf16.msra.mxu0 %v504
  %703 = vmatprep.subr.bf16.mxu0 %v501
  %704 = vmatpush1.bf16.msra.mxu0 %v500
  %705 = vmatprep.subr.bf16.mxu0 %v497
  %706 = vmatpush1.bf16.msra.mxu0 %v496
  %707 = vmatprep.subr.bf16.mxu0 %v493
  %708 = vmatpush1.bf16.msra.mxu0 %v492
  %709 = vmatprep.subr.bf16.mxu0 %v489
  %710 = vmatpush1.bf16.msra.mxu0 %v488
  %711 = vmatprep.subr.bf16.mxu0 %v549
  %712 = vmatpush2.bf16.msra.mxu0 %v548
  %713 = vmatprep.subr.bf16.mxu0 %v545
  %714 = vmatpush2.bf16.msra.mxu0 %v544
  %715 = vmatprep.subr.bf16.mxu0 %v541
  %716 = vmatpush2.bf16.msra.mxu0 %v540
  %717 = vmatprep.subr.bf16.mxu0 %v537
  %718 = vmatpush2.bf16.msra.mxu0 %v536
  %719 = vmatprep.subr.bf16.mxu0 %v533
  %720 = vmatpush2.bf16.msra.mxu0 %v532
  %721 = vmatprep.subr.bf16.mxu0 %v529
  %722 = vmatpush2.bf16.msra.mxu0 %v528
  %723 = vmatprep.subr.bf16.mxu0 %v525
  %724 = vmatpush2.bf16.msra.mxu0 %v524
  %725 = vmatprep.subr.bf16.mxu0 %v521
  %726 = vmatpush2.bf16.msra.mxu0 %v520
  %727 = vmatprep.mubr.bf16.mxu0 %v175
  %728 = vmatmul.mubr.bf16.gmra.mxu0 %v174
  %v729 = vpop.f32.mrf.mxu0
  %v730 = vadd.f32 %v133, %v729
  %v731 = vpop.f32.mrf.mxu0
  %v732 = vadd.f32 %v133, %v731
  %v733 = vpop.f32.mrf.mxu0
  %v734 = vadd.f32 %v138, %v733
  %v735 = vpop.f32.mrf.mxu0
  %v736 = vadd.f32 %v138, %v735
  %737 = vmatprep.mubr.bf16.mxu0 %v179
  %738 = vmatmul.mubr.bf16.gmra.mxu0 %v178
  %v739 = vpop.f32.mrf.mxu0
  %v740 = vadd.f32 %v143, %v739
  %v741 = vpop.f32.mrf.mxu0
  %v742 = vadd.f32 %v143, %v741
  %v743 = vpop.f32.mrf.mxu0
  %v744 = vadd.f32 %v148, %v743
  %v745 = vpop.f32.mrf.mxu0
  %v746 = vadd.f32 %v148, %v745
  %747 = vdwg.mxu0
  %748 = vmatprep.subr.bf16.mxu0 %v581
  %749 = vmatpush1.bf16.msra.mxu0 %v580
  %750 = vmatprep.subr.bf16.mxu0 %v577
  %751 = vmatpush1.bf16.msra.mxu0 %v576
  %752 = vmatprep.subr.bf16.mxu0 %v573
  %753 = vmatpush1.bf16.msra.mxu0 %v572
  %754 = vmatprep.subr.bf16.mxu0 %v569
  %755 = vmatpush1.bf16.msra.mxu0 %v568
  %756 = vmatprep.subr.bf16.mxu0 %v565
  %757 = vmatpush1.bf16.msra.mxu0 %v564
  %758 = vmatprep.subr.bf16.mxu0 %v561
  %759 = vmatpush1.bf16.msra.mxu0 %v560
  %760 = vmatprep.subr.bf16.mxu0 %v557
  %761 = vmatpush1.bf16.msra.mxu0 %v556
  %762 = vmatprep.subr.bf16.mxu0 %v553
  %763 = vmatpush1.bf16.msra.mxu0 %v552
  %764 = vmatprep.subr.bf16.mxu0 0
  %765 = vmatpush2.bf16.msra.mxu0 0
  %766 = vmatprep.subr.bf16.mxu0 0
  %767 = vmatpush2.bf16.msra.mxu0 0
  %768 = vmatprep.subr.bf16.mxu0 0
  %769 = vmatpush2.bf16.msra.mxu0 0
  %770 = vmatprep.subr.bf16.mxu0 0
  %771 = vmatpush2.bf16.msra.mxu0 0
  %772 = vmatprep.subr.bf16.mxu0 0
  %773 = vmatpush2.bf16.msra.mxu0 0
  %774 = vmatprep.subr.bf16.mxu0 0
  %775 = vmatpush2.bf16.msra.mxu0 0
  %776 = vmatprep.subr.bf16.mxu0 0
  %777 = vmatpush2.bf16.msra.mxu0 0
  %778 = vmatprep.subr.bf16.mxu0 %v585
  %779 = vmatpush2.bf16.msra.mxu0 %v584
  %780 = vmatprep.mubr.bf16.mxu0 %v690
  %781 = vmatmul.mubr.bf16.gmra.mxu0 %v176
  %v782 = vpop.f32.mrf.mxu0
  %v783 = vadd.f32 %v730, %v782
  %v784 = vpop.f32.mrf.mxu0
  %v785 = vadd.f32 %v732, %v784
  %v786 = vpop.f32.mrf.mxu0
  %v787 = vadd.f32 %v734, %v786
  %v788 = vpop.f32.mrf.mxu0
  %v789 = vadd.f32 %v736, %v788
  %790 = vmatprep.mubr.bf16.mxu0 %v693
  %791 = vmatmul.mubr.bf16.gmra.mxu0 %v180
  %v792 = vpop.f32.mrf.mxu0
  %v793 = vadd.f32 %v740, %v792
  %v794 = vpop.f32.mrf.mxu0
  %v795 = vadd.f32 %v742, %v794
  %v796 = vpop.f32.mrf.mxu0
  %v797 = vadd.f32 %v744, %v796
  %v798 = vpop.f32.mrf.mxu0
  %v799 = vadd.f32 %v746, %v798
  %800 = vdwg.mxu0
  %801 = vmatprep.subr.bf16.mxu0 %v519
  %802 = vmatpush1.bf16.msra.mxu0 %v518
  %803 = vmatprep.subr.bf16.mxu0 %v515
  %804 = vmatpush1.bf16.msra.mxu0 %v514
  %805 = vmatprep.subr.bf16.mxu0 %v511
  %806 = vmatpush1.bf16.msra.mxu0 %v510
  %807 = vmatprep.subr.bf16.mxu0 %v507
  %808 = vmatpush1.bf16.msra.mxu0 %v506
  %809 = vmatprep.subr.bf16.mxu0 %v503
  %810 = vmatpush1.bf16.msra.mxu0 %v502
  %811 = vmatprep.subr.bf16.mxu0 %v499
  %812 = vmatpush1.bf16.msra.mxu0 %v498
  %813 = vmatprep.subr.bf16.mxu0 %v495
  %814 = vmatpush1.bf16.msra.mxu0 %v494
  %815 = vmatprep.subr.bf16.mxu0 %v491
  %816 = vmatpush1.bf16.msra.mxu0 %v490
  %817 = vmatprep.subr.bf16.mxu0 %v551
  %818 = vmatpush2.bf16.msra.mxu0 %v550
  %819 = vmatprep.subr.bf16.mxu0 %v547
  %820 = vmatpush2.bf16.msra.mxu0 %v546
  %821 = vmatprep.subr.bf16.mxu0 %v543
  %822 = vmatpush2.bf16.msra.mxu0 %v542
  %823 = vmatprep.subr.bf16.mxu0 %v539
  %824 = vmatpush2.bf16.msra.mxu0 %v538
  %825 = vmatprep.subr.bf16.mxu0 %v535
  %826 = vmatpush2.bf16.msra.mxu0 %v534
  %827 = vmatprep.subr.bf16.mxu0 %v531
  %828 = vmatpush2.bf16.msra.mxu0 %v530
  %829 = vmatprep.subr.bf16.mxu0 %v527
  %830 = vmatpush2.bf16.msra.mxu0 %v526
  %831 = vmatprep.subr.bf16.mxu0 %v523
  %832 = vmatpush2.bf16.msra.mxu0 %v522
  %833 = vmatprep.mubr.bf16.mxu0 %v175
  %834 = vmatmul.mubr.bf16.gmra.mxu0 %v174
  %v835 = vpop.f32.mrf.mxu0
  %v836 = vadd.f32 %v133, %v835
  %v837 = vpop.f32.mrf.mxu0
  %v838 = vadd.f32 %v133, %v837
  %v839 = vpop.f32.mrf.mxu0
  %v840 = vadd.f32 %v138, %v839
  %v841 = vpop.f32.mrf.mxu0
  %v842 = vadd.f32 %v138, %v841
  %843 = vmatprep.mubr.bf16.mxu0 %v179
  %844 = vmatmul.mubr.bf16.gmra.mxu0 %v178
  %v845 = vpop.f32.mrf.mxu0
  %v846 = vadd.f32 %v143, %v845
  %v847 = vpop.f32.mrf.mxu0
  %v848 = vadd.f32 %v143, %v847
  %v849 = vpop.f32.mrf.mxu0
  %v850 = vadd.f32 %v148, %v849
  %v851 = vpop.f32.mrf.mxu0
  %v852 = vadd.f32 %v148, %v851
  %853 = vdwg.mxu0
  %854 = vmatprep.subr.bf16.mxu0 %v583
  %855 = vmatpush1.bf16.msra.mxu0 %v582
  %856 = vmatprep.subr.bf16.mxu0 %v579
  %857 = vmatpush1.bf16.msra.mxu0 %v578
  %858 = vmatprep.subr.bf16.mxu0 %v575
  %859 = vmatpush1.bf16.msra.mxu0 %v574
  %860 = vmatprep.subr.bf16.mxu0 %v571
  %861 = vmatpush1.bf16.msra.mxu0 %v570
  %862 = vmatprep.subr.bf16.mxu0 %v567
  %863 = vmatpush1.bf16.msra.mxu0 %v566
  %864 = vmatprep.subr.bf16.mxu0 %v563
  %865 = vmatpush1.bf16.msra.mxu0 %v562
  %866 = vmatprep.subr.bf16.mxu0 %v559
  %867 = vmatpush1.bf16.msra.mxu0 %v558
  %868 = vmatprep.subr.bf16.mxu0 %v555
  %869 = vmatpush1.bf16.msra.mxu0 %v554
  %870 = vmatprep.subr.bf16.mxu0 0
  %871 = vmatpush2.bf16.msra.mxu0 0
  %872 = vmatprep.subr.bf16.mxu0 0
  %873 = vmatpush2.bf16.msra.mxu0 0
  %874 = vmatprep.subr.bf16.mxu0 0
  %875 = vmatpush2.bf16.msra.mxu0 0
  %876 = vmatprep.subr.bf16.mxu0 0
  %877 = vmatpush2.bf16.msra.mxu0 0
  %878 = vmatprep.subr.bf16.mxu0 0
  %879 = vmatpush2.bf16.msra.mxu0 0
  %880 = vmatprep.subr.bf16.mxu0 0
  %881 = vmatpush2.bf16.msra.mxu0 0
  %882 = vmatprep.subr.bf16.mxu0 0
  %883 = vmatpush2.bf16.msra.mxu0 0
  %884 = vmatprep.subr.bf16.mxu0 %v587
  %885 = vmatpush2.bf16.msra.mxu0 %v586
  %886 = vmatprep.mubr.bf16.mxu0 %v690
  %887 = vmatmul.mubr.bf16.gmra.mxu0 %v176
  %v888 = vpop.f32.mrf.mxu0
  %v889 = vadd.f32 %v836, %v888
  %v890 = vpop.f32.mrf.mxu0
  %v891 = vadd.f32 %v838, %v890
  %v892 = vpop.f32.mrf.mxu0
  %v893 = vadd.f32 %v840, %v892
  %v894 = vpop.f32.mrf.mxu0
  %v895 = vadd.f32 %v842, %v894
  %896 = vmatprep.mubr.bf16.mxu0 %v693
  %897 = vmatmul.mubr.bf16.gmra.mxu0 %v180
  %v898 = vpop.f32.mrf.mxu0
  %v899 = vadd.f32 %v846, %v898
  %v900 = vpop.f32.mrf.mxu0
  %v901 = vadd.f32 %v848, %v900
  %v902 = vpop.f32.mrf.mxu0
  %v903 = vadd.f32 %v850, %v902
  %v904 = vpop.f32.mrf.mxu0
  %v905 = vadd.f32 %v852, %v904
  %906 = vdwg.mxu0
  %v907 = vmax.f32 %v783, 0.0
  %v908 = vmax.f32 %v785, 0.0
  %v909 = vmax.f32 %v889, 0.0
  %v910 = vmax.f32 %v891, 0.0
  %v911 = vmax.f32 %v787, 0.0
  %v912 = vmax.f32 %v789, 0.0
  %v913 = vmax.f32 %v893, 0.0
  %v914 = vmax.f32 %v895, 0.0
  %v915 = vmax.f32 %v793, 0.0
  %v916 = vmax.f32 %v795, 0.0
  %v917 = vmax.f32 %v899, 0.0
  %v918 = vmax.f32 %v901, 0.0
  %v919 = vmax.f32 %v797, 0.0
  %v920 = vmax.f32 %v799, 0.0
  %v921 = vmax.f32 %v903, 0.0
  %v922 = vmax.f32 %v905, 0.0
  %v923 = vpack.c.bf16 %v911, %v907
  %v924 = vpack.c.bf16 %v912, %v908
  %v925 = vpack.c.bf16 %v913, %v909
  %v926 = vpack.c.bf16 %v914, %v910
  %v927 = vpack.c.bf16 %v919, %v915
  %v928 = vpack.c.bf16 %v920, %v916
  %v929 = vpack.c.bf16 %v921, %v917
  %v930 = vpack.c.bf16 %v922, %v918
  %v931 = vld [vmem:[%s3] sm:$0xf]
  %v932 = vld [vmem:[%s3 + $0x4] sm:$0xf]
  %v933 = vld [vmem:[%s3 + $0x8] sm:$0xf]
  %v934 = vld [vmem:[%s3 + $0xc] sm:$0xf]
  %v935 = vld [vmem:[%s3 + $0x10] sm:$0xf]
  %v936 = vld [vmem:[%s3 + $0x14] sm:$0xf]
  %v937 = vld [vmem:[%s3 + $0x18] sm:$0xf]
  %v938 = vld [vmem:[%s3 + $0x1c] sm:$0xf]
  %v939 = vld [vmem:[%s3 + $0x20] sm:$0xf]
  %v940 = vld [vmem:[%s3 + $0x24] sm:$0xf]
  %v941 = vld [vmem:[%s3 + $0x28] sm:$0xf]
  %v942 = vld [vmem:[%s3 + $0x2c] sm:$0xf]
  %v943 = vld [vmem:[%s3 + $0x30] sm:$0xf]
  %v944 = vld [vmem:[%s3 + $0x34] sm:$0xf]
  %v945 = vld [vmem:[%s3 + $0x38] sm:$0xf]
  %v946 = vld [vmem:[%s3 + $0x3c] sm:$0xf]
  %v947 = vld [vmem:[%s3 + $0x40] sm:$0xf]
  %v948 = vld [vmem:[%s3 + $0x44] sm:$0xf]
  %v949 = vld [vmem:[%s3 + $0x48] sm:$0xf]
  %v950 = vld [vmem:[%s3 + $0x4c] sm:$0xf]
  %v951 = vld [vmem:[%s3 + $0x50] sm:$0xf]
  %v952 = vld [vmem:[%s3 + $0x54] sm:$0xf]
  %v953 = vld [vmem:[%s3 + $0x58] sm:$0xf]
  %v954 = vld [vmem:[%s3 + $0x5c] sm:$0xf]
  %v955 = vld [vmem:[%s3 + $0x60] sm:$0xf]
  %v956 = vld [vmem:[%s3 + $0x64] sm:$0xf]
  %v957 = vld [vmem:[%s3 + $0x68] sm:$0xf]
  %v958 = vld [vmem:[%s3 + $0x6c] sm:$0xf]
  %v959 = vld [vmem:[%s3 + $0x70] sm:$0xf]
  %v960 = vld [vmem:[%s3 + $0x74] sm:$0xf]
  %v961 = vld [vmem:[%s3 + $0x78] sm:$0xf]
  %v962 = vld [vmem:[%s3 + $0x7c] sm:$0xf]
  %v963 = vld [vmem:[%s3 + $0x80] sm:$0xf]
  %v964 = vld [vmem:[%s3 + $0x84] sm:$0xf]
  %v965 = vld [vmem:[%s3 + $0x88] sm:$0xf]
  %v966 = vld [vmem:[%s3 + $0x8c] sm:$0xf]
  %v967 = vld [vmem:[%s3 + $0x90] sm:$0xf]
  %v968 = vld [vmem:[%s3 + $0x94] sm:$0xf]
  %v969 = vld [vmem:[%s3 + $0x98] sm:$0xf]
  %v970 = vld [vmem:[%s3 + $0x9c] sm:$0xf]
  %v971 = vld [vmem:[%s3 + $0xa0] sm:$0xf]
  %v972 = vld [vmem:[%s3 + $0xa4] sm:$0xf]
  %v973 = vld [vmem:[%s3 + $0xa8] sm:$0xf]
  %v974 = vld [vmem:[%s3 + $0xac] sm:$0xf]
  %v975 = vld [vmem:[%s3 + $0xb0] sm:$0xf]
  %v976 = vld [vmem:[%s3 + $0xb4] sm:$0xf]
  %v977 = vld [vmem:[%s3 + $0xb8] sm:$0xf]
  %v978 = vld [vmem:[%s3 + $0xbc] sm:$0xf]
  %v979 = vld [vmem:[%s3 + $0xc0] sm:$0xf]
  %v980 = vld [vmem:[%s3 + $0xc4] sm:$0xf]
  %v981 = vld [vmem:[%s3 + $0xc8] sm:$0xf]
  %v982 = vld [vmem:[%s3 + $0xcc] sm:$0xf]
  %v983 = vld [vmem:[%s3 + $0xd0] sm:$0xf]
  %v984 = vld [vmem:[%s3 + $0xd4] sm:$0xf]
  %v985 = vld [vmem:[%s3 + $0xd8] sm:$0xf]
  %v986 = vld [vmem:[%s3 + $0xdc] sm:$0xf]
  %v987 = vld [vmem:[%s3 + $0xe0] sm:$0xf]
  %v988 = vld [vmem:[%s3 + $0xe4] sm:$0xf]
  %v989 = vld [vmem:[%s3 + $0xe8] sm:$0xf]
  %v990 = vld [vmem:[%s3 + $0xec] sm:$0xf]
  %v991 = vld [vmem:[%s3 + $0xf0] sm:$0xf]
  %v992 = vld [vmem:[%s3 + $0xf4] sm:$0xf]
  %v993 = vld [vmem:[%s3 + $0xf8] sm:$0xf]
  %v994 = vld [vmem:[%s3 + $0xfc] sm:$0xf]
  %v1059 = vunpack.c.l.b16 %v931
  %v1060 = vunpack.c.l.b16 %v932
  %v1061 = vunpack.c.l.b16 %v933
  %v1062 = vunpack.c.l.b16 %v934
  %v1063 = vunpack.c.l.b16 %v935
  %v1064 = vunpack.c.l.b16 %v936
  %v1065 = vunpack.c.l.b16 %v937
  %v1066 = vunpack.c.l.b16 %v938
  %v1067 = vunpack.c.l.b16 %v939
  %v1068 = vunpack.c.l.b16 %v940
  %v1069 = vunpack.c.l.b16 %v941
  %v1070 = vunpack.c.l.b16 %v942
  %v1071 = vunpack.c.l.b16 %v943
  %v1072 = vunpack.c.l.b16 %v944
  %v1073 = vunpack.c.l.b16 %v945
  %v1074 = vunpack.c.l.b16 %v946
  %v1075 = vunpack.c.l.b16 %v947
  %v1076 = vunpack.c.l.b16 %v948
  %v1077 = vunpack.c.l.b16 %v949
  %v1078 = vunpack.c.l.b16 %v950
  %v1079 = vunpack.c.l.b16 %v951
  %v1080 = vunpack.c.l.b16 %v952
  %v1081 = vunpack.c.l.b16 %v953
  %v1082 = vunpack.c.l.b16 %v954
  %v1083 = vunpack.c.l.b16 %v955
  %v1084 = vunpack.c.l.b16 %v956
  %v1085 = vunpack.c.l.b16 %v957
  %v1086 = vunpack.c.l.b16 %v958
  %v1087 = vunpack.c.l.b16 %v959
  %v1088 = vunpack.c.l.b16 %v960
  %v1089 = vunpack.c.l.b16 %v961
  %v1090 = vunpack.c.l.b16 %v962
  %v1091 = vunpack.c.l.b16 %v963
  %v1092 = vunpack.c.l.b16 %v964
  %v1093 = vunpack.c.l.b16 %v965
  %v1094 = vunpack.c.l.b16 %v966
  %v1095 = vunpack.c.l.b16 %v967
  %v1096 = vunpack.c.l.b16 %v968
  %v1097 = vunpack.c.l.b16 %v969
  %v1098 = vunpack.c.l.b16 %v970
  %v1099 = vunpack.c.l.b16 %v971
  %v1100 = vunpack.c.l.b16 %v972
  %v1101 = vunpack.c.l.b16 %v973
  %v1102 = vunpack.c.l.b16 %v974
  %v1103 = vunpack.c.l.b16 %v975
  %v1104 = vunpack.c.l.b16 %v976
  %v1105 = vunpack.c.l.b16 %v977
  %v1106 = vunpack.c.l.b16 %v978
  %v1107 = vunpack.c.l.b16 %v979
  %v1108 = vunpack.c.l.b16 %v980
  %v1109 = vunpack.c.l.b16 %v981
  %v1110 = vunpack.c.l.b16 %v982
  %v1111 = vunpack.c.l.b16 %v983
  %v1112 = vunpack.c.l.b16 %v984
  %v1113 = vunpack.c.l.b16 %v985
  %v1114 = vunpack.c.l.b16 %v986
  %v1115 = vunpack.c.l.b16 %v987
  %v1116 = vunpack.c.l.b16 %v988
  %v1117 = vunpack.c.l.b16 %v989
  %v1118 = vunpack.c.l.b16 %v990
  %v1119 = vunpack.c.l.b16 %v991
  %v1120 = vunpack.c.l.b16 %v992
  %v1121 = vunpack.c.l.b16 %v993
  %v1122 = vunpack.c.l.b16 %v994
  %v1123 = vpack.c.b16 %v1060, %v1059
  %v1124 = vpack.c.b16 %v1062, %v1061
  %v1125 = vpack.c.b16 %v1064, %v1063
  %v1126 = vpack.c.b16 %v1066, %v1065
  %v1127 = vpack.c.b16 %v1068, %v1067
  %v1128 = vpack.c.b16 %v1070, %v1069
  %v1129 = vpack.c.b16 %v1072, %v1071
  %v1130 = vpack.c.b16 %v1074, %v1073
  %v1131 = vpack.c.b16 %v1076, %v1075
  %v1132 = vpack.c.b16 %v1078, %v1077
  %v1133 = vpack.c.b16 %v1080, %v1079
  %v1134 = vpack.c.b16 %v1082, %v1081
  %v1135 = vpack.c.b16 %v1084, %v1083
  %v1136 = vpack.c.b16 %v1086, %v1085
  %v1137 = vpack.c.b16 %v1088, %v1087
  %v1138 = vpack.c.b16 %v1090, %v1089
  %v1139 = vpack.c.b16 %v1092, %v1091
  %v1140 = vpack.c.b16 %v1094, %v1093
  %v1141 = vpack.c.b16 %v1096, %v1095
  %v1142 = vpack.c.b16 %v1098, %v1097
  %v1143 = vpack.c.b16 %v1100, %v1099
  %v1144 = vpack.c.b16 %v1102, %v1101
  %v1145 = vpack.c.b16 %v1104, %v1103
  %v1146 = vpack.c.b16 %v1106, %v1105
  %v1147 = vpack.c.b16 %v1108, %v1107
  %v1148 = vpack.c.b16 %v1110, %v1109
  %v1149 = vpack.c.b16 %v1112, %v1111
  %v1150 = vpack.c.b16 %v1114, %v1113
  %v1151 = vpack.c.b16 %v1116, %v1115
  %v1152 = vpack.c.b16 %v1118, %v1117
  %v1153 = vpack.c.b16 %v1120, %v1119
  %v1154 = vpack.c.b16 %v1122, %v1121
  %1187 = vmatprep.subr.bf16.mxu0 0
  %1188 = vmatpush1.bf16.msra.mxu0 %v1130
  %1189 = vmatprep.subr.bf16.mxu0 0
  %1190 = vmatpush1.bf16.msra.mxu0 %v1129
  %1191 = vmatprep.subr.bf16.mxu0 0
  %1192 = vmatpush1.bf16.msra.mxu0 %v1128
  %1193 = vmatprep.subr.bf16.mxu0 0
  %1194 = vmatpush1.bf16.msra.mxu0 %v1127
  %1195 = vmatprep.subr.bf16.mxu0 0
  %1196 = vmatpush1.bf16.msra.mxu0 %v1126
  %1197 = vmatprep.subr.bf16.mxu0 0
  %1198 = vmatpush1.bf16.msra.mxu0 %v1125
  %1199 = vmatprep.subr.bf16.mxu0 0
  %1200 = vmatpush1.bf16.msra.mxu0 %v1124
  %1201 = vmatprep.subr.bf16.mxu0 0
  %1202 = vmatpush1.bf16.msra.mxu0 %v1123
  %1203 = vmatprep.subr.bf16.mxu0 0
  %1204 = vmatpush2.bf16.msra.mxu0 %v1138
  %1205 = vmatprep.subr.bf16.mxu0 0
  %1206 = vmatpush2.bf16.msra.mxu0 %v1137
  %1207 = vmatprep.subr.bf16.mxu0 0
  %1208 = vmatpush2.bf16.msra.mxu0 %v1136
  %1209 = vmatprep.subr.bf16.mxu0 0
  %1210 = vmatpush2.bf16.msra.mxu0 %v1135
  %1211 = vmatprep.subr.bf16.mxu0 0
  %1212 = vmatpush2.bf16.msra.mxu0 %v1134
  %1213 = vmatprep.subr.bf16.mxu0 0
  %1214 = vmatpush2.bf16.msra.mxu0 %v1133
  %1215 = vmatprep.subr.bf16.mxu0 0
  %1216 = vmatpush2.bf16.msra.mxu0 %v1132
  %1217 = vmatprep.subr.bf16.mxu0 0
  %1218 = vmatpush2.bf16.msra.mxu0 %v1131
  %1219 = vmatprep.mubr.bf16.mxu0 %v924
  %1220 = vmatmul.mubr.bf16.gmra.mxu0 %v923
  %v1221 = vpop.f32.mrf.mxu0
  %v1222 = vadd.f32 0.0, %v1221
  %v1223 = vpop.f32.mrf.mxu0
  %v1224 = vpop.f32.mrf.mxu0
  %v1225 = vadd.f32 0.0, %v1224
  %v1226 = vpop.f32.mrf.mxu0
  %1227 = vmatprep.mubr.bf16.mxu0 %v928
  %1228 = vmatmul.mubr.bf16.gmra.mxu0 %v927
  %v1229 = vpop.f32.mrf.mxu0
  %v1230 = vadd.f32 0.0, %v1229
  %v1231 = vpop.f32.mrf.mxu0
  %v1232 = vpop.f32.mrf.mxu0
  %v1233 = vadd.f32 0.0, %v1232
  %v1234 = vpop.f32.mrf.mxu0
  %1235 = vdwg.mxu0
  %1236 = vmatprep.subr.bf16.mxu0 0
  %1237 = vmatpush1.bf16.msra.mxu0 %v1146
  %1238 = vmatprep.subr.bf16.mxu0 0
  %1239 = vmatpush1.bf16.msra.mxu0 %v1145
  %1240 = vmatprep.subr.bf16.mxu0 0
  %1241 = vmatpush1.bf16.msra.mxu0 %v1144
  %1242 = vmatprep.subr.bf16.mxu0 0
  %1243 = vmatpush1.bf16.msra.mxu0 %v1143
  %1244 = vmatprep.subr.bf16.mxu0 0
  %1245 = vmatpush1.bf16.msra.mxu0 %v1142
  %1246 = vmatprep.subr.bf16.mxu0 0
  %1247 = vmatpush1.bf16.msra.mxu0 %v1141
  %1248 = vmatprep.subr.bf16.mxu0 0
  %1249 = vmatpush1.bf16.msra.mxu0 %v1140
  %1250 = vmatprep.subr.bf16.mxu0 0
  %1251 = vmatpush1.bf16.msra.mxu0 %v1139
  %1252 = vmatprep.subr.bf16.mxu0 0
  %1253 = vmatpush2.bf16.msra.mxu0 %v1154
  %1254 = vmatprep.subr.bf16.mxu0 0
  %1255 = vmatpush2.bf16.msra.mxu0 %v1153
  %1256 = vmatprep.subr.bf16.mxu0 0
  %1257 = vmatpush2.bf16.msra.mxu0 %v1152
  %1258 = vmatprep.subr.bf16.mxu0 0
  %1259 = vmatpush2.bf16.msra.mxu0 %v1151
  %1260 = vmatprep.subr.bf16.mxu0 0
  %1261 = vmatpush2.bf16.msra.mxu0 %v1150
  %1262 = vmatprep.subr.bf16.mxu0 0
  %1263 = vmatpush2.bf16.msra.mxu0 %v1149
  %1264 = vmatprep.subr.bf16.mxu0 0
  %1265 = vmatpush2.bf16.msra.mxu0 %v1148
  %1266 = vmatprep.subr.bf16.mxu0 0
  %1267 = vmatpush2.bf16.msra.mxu0 %v1147
  %1268 = vmatprep.mubr.bf16.mxu0 %v926
  %1269 = vmatmul.mubr.bf16.gmra.mxu0 %v925
  %v1270 = vpop.f32.mrf.mxu0
  %v1271 = vadd.f32 %v1222, %v1270
  %v1272 = vpop.f32.mrf.mxu0
  %v1273 = vpop.f32.mrf.mxu0
  %v1274 = vadd.f32 %v1225, %v1273
  %v1275 = vpop.f32.mrf.mxu0
  %1276 = vmatprep.mubr.bf16.mxu0 %v930
  %1277 = vmatmul.mubr.bf16.gmra.mxu0 %v929
  %v1278 = vpop.f32.mrf.mxu0
  %v1279 = vadd.f32 %v1230, %v1278
  %v1280 = vpop.f32.mrf.mxu0
  %v1281 = vpop.f32.mrf.mxu0
  %v1282 = vadd.f32 %v1233, %v1281
  %v1283 = vpop.f32.mrf.mxu0
  %1284 = vdwg.mxu0
  %1285 = vst [vmem:[%s4] sm:$0xff] %v1271
  %1286 = vst [vmem:[%s4 + $0x8] sm:$0xff] %v1274
  %1287 = vst [vmem:[%s4 + $0x10] sm:$0xff] %v1279
  %1288 = vst [vmem:[%s4 + $0x18] sm:$0xff] %v1282
  // Predicated region
  $region18: #{vision_cnn_encoder.3} parent=0 // pred_check
    _
  $region19: #{vision_cnn_encoder.3} parent=0 // pred_check_branch
    %1290 = sbr.rel (0) target = $region21
  $region20: #{vision_cnn_encoder.3} parent=0 // pred_region
    _
  $region21: #{vision_cnn_encoder.3} parent=0 // pred_fallthru
    _
  // Predicated region
  $region22: #{vision_cnn_encoder.3} parent=0 // pred_check
    _
  $region23: #{vision_cnn_encoder.3} parent=0 // pred_check_branch
    %1292 = sbr.rel (0) target = $region25
  $region24: #{vision_cnn_encoder.3} parent=0 // pred_region
    _
  $region25: #{vision_cnn_encoder.3} parent=0 // pred_fallthru
    _

</llo_original>
